<compile_context>
chip_gen: v5e
topology: v5e:2x2
jax: 0.10.0
libtpu: 0.0.40
codegen_flags: <defaults>
</compile_context>

<pallas_src>
import math
import functools

import jax
import jax.numpy as jnp
from jax.experimental import pallas as pl
from jax.experimental.pallas import tpu as pltpu


# ---------------------------------------------------------------------------
# Shared attention body (operates on data already resident in VMEM / vregs).
# ---------------------------------------------------------------------------
def _attention_and_output(q2d, k2d, v2d, mask, wo, bo, Bt, S, E, H, Dh, cdt):
    """q2d/k2d/v2d: (Bt*S, E) f32 projections; mask: (S, S) int; returns (Bt, S, E) f32."""
    M = Bt * S
    fast = cdt != jnp.dtype(jnp.float32)

    # Fold 1/sqrt(Dh) into Q once (M*E muls) instead of scaling (H, S, S) scores.
    q2d = q2d * jnp.float32(1.0 / math.sqrt(Dh))

    q3 = q2d.reshape(Bt, S, E).astype(cdt)
    k3 = k2d.reshape(Bt, S, E).astype(cdt)
    v3 = v2d.reshape(Bt, S, E).astype(cdt)

    # Hoisted mask work: build the (Bt, S, S) select operand ONCE (JAX does not CSE
    # broadcast_in_dim across the head loop).  jnp.where keeps exact
    # masked_fill_(-1e9) parity with the PyTorch module.
    mask_b = jnp.broadcast_to((mask != 0)[None, :, :], (Bt, S, S))
    neg = jnp.float32(-1e9)

    # Per-head attention on static lane slices: only ONE head's (Bt, S, S) score tile
    # is live at a time.  Softmax stats stay in f32 (no bf16 VPU/EUP path on v5e).
    # TODO(synk): for large H move heads to an 'arbitrary' grid axis; for long S add
    # flash-style (q, kv) tiling with an online-softmax accumulator, gating the tile
    # size on 64 MiB VMEM (v7x).
    ctx_heads = []
    for h in range(H):
        lo = h * Dh
        qh = q3[:, :, lo:lo + Dh]                                   # (Bt, S, Dh)
        kh = k3[:, :, lo:lo + Dh]
        vh = v3[:, :, lo:lo + Dh]

        s = jnp.einsum('bqd,bkd->bqk', qh, kh,
                       preferred_element_type=jnp.float32)          # (Bt, S, S) f32
        s = jnp.where(mask_b, neg, s)                               # masked_fill_(-1e9)

        m = jnp.max(s, axis=-1, keepdims=True)
        e = jnp.exp(s - m)
        denom = jnp.sum(e, axis=-1, keepdims=True)                  # (Bt, S, 1)

        # Deferred normalization: unnormalized e @ V, then one (Bt, S, 1) reciprocal.
        ctx_h = jnp.einsum('bqk,bkd->bqd', e.astype(cdt), vh,
                           preferred_element_type=jnp.float32)      # (Bt, S, Dh) f32
        inv = pl.reciprocal(denom, approx=True) if fast else 1.0 / denom
        ctx_heads.append((ctx_h * inv).astype(cdt))
    # TODO(synk): nn.Dropout on the attention probs is identity in eval mode;
    # training-mode dropout randomness is not reproduced here.

    # Lane-dense context slab in the COMPUTE dtype (no f32 scratch, no per-head
    # sub-lane masked stores): one concatenate feeding one tall output projection.
    ctx = jnp.concatenate(ctx_heads, axis=-1).reshape(M, E)
    out = jnp.dot(ctx, wo, preferred_element_type=jnp.float32) + bo
    return out.reshape(Bt, S, E)


# ---------------------------------------------------------------------------
# Kernels
# ---------------------------------------------------------------------------
def _mha_cross_kernel(xq_ref, xk_ref, xv_ref, mask_ref,
                      wq_ref, bq_ref, wk_ref, bk_ref,
                      wv_ref, bv_ref, wo_ref, bo_ref,
                      out_ref, *, num_heads, head_dim, compute_dtype):
    """General path: distinct query / key / value tensors."""
    Bt, S, E = xq_ref.shape
    M = Bt * S
    cdt = jnp.dtype(compute_dtype)

    # Flatten (Bt, S, E) -> (Bt*S, E): each projection is one tall 2-D MXU matmul.
    xq = xq_ref[...].reshape(M, E)
    xk = xk_ref[...].reshape(M, E)
    xv = xv_ref[...].reshape(M, E)

    q2d = jnp.dot(xq, wq_ref[...], preferred_element_type=jnp.float32) + bq_ref[...]
    k2d = jnp.dot(xk, wk_ref[...], preferred_element_type=jnp.float32) + bk_ref[...]
    v2d = jnp.dot(xv, wv_ref[...], preferred_element_type=jnp.float32) + bv_ref[...]

    out = _attention_and_output(q2d, k2d, v2d, mask_ref[...], wo_ref[...], bo_ref[...],
                                Bt, S, E, num_heads, head_dim, cdt)
    out_ref[...] = out.astype(out_ref.dtype)


def _mha_self_kernel(x_ref, mask_ref, wqkv_ref, bqkv_ref, wo_ref, bo_ref,
                     out_ref, *, num_heads, head_dim, compute_dtype):
    """Self-attention fast path: fused (E, 3E) QKV weight, x streamed once."""
    Bt, S, E = x_ref.shape
    M = Bt * S
    cdt = jnp.dtype(compute_dtype)

    x = x_ref[...].reshape(M, E)
    qkv = jnp.dot(x, wqkv_ref[...], preferred_element_type=jnp.float32) + bqkv_ref[...]
    q2d = qkv[:, :E]
    k2d = qkv[:, E:2 * E]
    v2d = qkv[:, 2 * E:]

    out = _attention_and_output(q2d, k2d, v2d, mask_ref[...], wo_ref[...], bo_ref[...],
                                Bt, S, E, num_heads, head_dim, cdt)
    out_ref[...] = out.astype(out_ref.dtype)


# ---------------------------------------------------------------------------
# Tiling / spec helpers
# ---------------------------------------------------------------------------
def _vmem_estimate(bt, seq, embed, in_bytes):
    """Rough per-step VMEM bytes: pipelined I/O blocks + live activations + weights."""
    m = bt * seq
    io = 3 * m * embed * in_bytes * 2 + m * embed * 4 * 2    # inputs (dbl-buf) + output
    act = 4 * m * embed * 4                                  # q/k/v f32 + ctx slab
    score = 3 * bt * seq * seq * 4                           # one head's s/e/where temps
    wgt = (4 * embed * embed + 8 * embed) * in_bytes         # single-buffered weights
    return io + act + score + wgt


def _pick_batch_tile(batch, seq, embed, in_bytes,
                     target_rows=512, vmem_budget=40 * 1024 * 1024):
    """Batch tile Bt so Bt*seq ~ target_rows (keeps the 256-wide v6e/v7x MXU fed and the
    pipeline in the measured 512-1024-row sweet spot), capped so the 'parallel' grid has
    >= 2 steps (v7x dual-TC sharding) and the per-step VMEM estimate fits the budget.
    Remainders are handled by batch padding in the wrapper (no divisor requirement)."""
    bt = max(1, -(-target_rows // seq))          # ceil(target_rows / seq)
    bt = min(bt, batch)
    if batch >= 2:
        bt = min(bt, -(-batch // 2))             # keep grid >= 2 steps
    while bt > 1 and _vmem_estimate(bt, seq, embed, in_bytes) > vmem_budget:
        bt -= 1
    return max(bt, 1)


def _const_spec(shape):
    """BlockSpec for constant-index operands (mask / weights / biases): single-buffered
    so they don't waste a duplicate VMEM copy (matters most on v7x's 64 MiB)."""
    idx = lambda b: (0,) * len(shape)
    try:
        return pl.BlockSpec(shape, idx, pipeline_mode=pl.Buffered(1))
    except (TypeError, AttributeError):
        return pl.BlockSpec(shape, idx)


# ---------------------------------------------------------------------------
# Wrapper
# ---------------------------------------------------------------------------
def prepare_mha_params(params, compute_dtype=jnp.float32):
    """One-time weight prep, hoisted out of the hot path: transpose PyTorch (out, in)
    Linear weights to (in, out), cast matmul operands to the compute dtype, and build
    the fused (E, 3E) QKV weight used by the self-attention fast path.
    TODO(synk): optional fp8 projection operands on v7x behind a flag (keep QK^T /
    softmax / PV in bf16/f32 with f32 accumulation)."""
    cdt = jnp.dtype(compute_dtype)
    E = params['wq'].shape[0]
    prep = {
        'compute_dtype': cdt,
        'wq_t': jnp.asarray(params['wq']).T.astype(cdt),
        'wk_t': jnp.asarray(params['wk']).T.astype(cdt),
        'wv_t': jnp.asarray(params['wv']).T.astype(cdt),
        'wo_t': jnp.asarray(params['wo']).T.astype(cdt),
        'bq': jnp.asarray(params['bq']).reshape(1, E).astype(jnp.float32),
        'bk': jnp.asarray(params['bk']).reshape(1, E).astype(jnp.float32),
        'bv': jnp.asarray(params['bv']).reshape(1, E).astype(jnp.float32),
        'bo': jnp.asarray(params['bo']).reshape(1, E).astype(jnp.float32),
    }
    prep['wqkv_t'] = jnp.concatenate([prep['wq_t'], prep['wk_t'], prep['wv_t']], axis=1)
    prep['bqkv'] = jnp.concatenate([prep['bq'], prep['bk'], prep['bv']], axis=1)
    return prep


def custom_multihead_attention(query, key, value, attn_mask, prepared, num_heads):
    """Forward pass of CustomMultiheadAttention (eval mode).

    query/key/value: (B, S, E); attn_mask: (S, S), nonzero == masked (filled with -1e9).
    `prepared` comes from prepare_mha_params() (weights pre-transposed / pre-cast once).
    """
    B, S, E = query.shape
    assert E % num_heads == 0, "embed_dim must be divisible by num_heads"
    head_dim = E // num_heads
    cdt = prepared['compute_dtype']
    out_dtype = query.dtype
    in_bytes = jnp.dtype(cdt).itemsize

    # NOTE: S should be a multiple of 8 (16 for bf16 blocks) so the in-kernel
    # (Bt, S, E) -> (Bt*S, E) reshape is copy-free; pad S in the caller otherwise.
    # TODO(synk): for very narrow models (E or head_dim < 128, esp. on v5e), pad the
    # lane dim to 128 in the wrapper and slice after the call for full-lane MXU/stores.

    self_attn = (query is key) and (key is value)
    mask_i32 = jnp.asarray(attn_mask).astype(jnp.int32)

    Bt = _pick_batch_tile(B, S, E, in_bytes)
    num_blocks = pl.cdiv(B, Bt)
    B_pad = num_blocks * Bt

    def pad_b(x):
        x = x.astype(cdt)
        if B_pad != B:
            x = jnp.pad(x, ((0, B_pad - B), (0, 0), (0, 0)))
        return x

    batch_spec = pl.BlockSpec((Bt, S, E), lambda b: (b, 0, 0))
    out_spec = pl.BlockSpec((Bt, S, E), lambda b: (b, 0, 0))

    # Scoped-VMEM limit from the per-step estimate; capped at 64 MiB so it is valid on
    # v7x (64 MiB physical).  On v5e/v6e (128 MiB) this can be raised when growing Bt.
    est = _vmem_estimate(Bt, S, E, in_bytes)
    vmem_limit = int(min(64 * 1024 * 1024, max(32 * 1024 * 1024, 2 * est)))

    cparams = pltpu.CompilerParams(
        dimension_semantics=("parallel",),     # batch blocks shard across TCs (v7x)
        vmem_limit_bytes=vmem_limit,
    )

    if self_attn:
        kernel = functools.partial(_mha_self_kernel, num_heads=num_heads,
                                   head_dim=head_dim, compute_dtype=cdt)
        out = pl.pallas_call(
            kernel,
            out_shape=jax.ShapeDtypeStruct((B_pad, S, E), out_dtype),
            grid_spec=pltpu.PrefetchScalarGridSpec(
                num_scalar_prefetch=0,
                grid=(num_blocks,),
                in_specs=[
                    batch_spec,                         # x (query == key == value)
                    _const_spec((S, S)),                # attn_mask
                    _const_spec((E, 3 * E)),            # [Wq|Wk|Wv]^T fused
                    _const_spec((1, 3 * E)),            # [bq|bk|bv]
                    _const_spec((E, E)),                # Wo^T
                    _const_spec((1, E)),                # bo
                ],
                out_specs=out_spec),
            compiler_params=cparams,
        )(pad_b(query), mask_i32,
          prepared['wqkv_t'], prepared['bqkv'], prepared['wo_t'], prepared['bo'])
    else:
        kernel = functools.partial(_mha_cross_kernel, num_heads=num_heads,
                                   head_dim=head_dim, compute_dtype=cdt)
        out = pl.pallas_call(
            kernel,
            out_shape=jax.ShapeDtypeStruct((B_pad, S, E), out_dtype),
            grid_spec=pltpu.PrefetchScalarGridSpec(
                num_scalar_prefetch=0,
                grid=(num_blocks,),
                in_specs=[
                    batch_spec, batch_spec, batch_spec,            # query / key / value
                    _const_spec((S, S)),                           # attn_mask
                    _const_spec((E, E)), _const_spec((1, E)),      # Wq^T, bq
                    _const_spec((E, E)), _const_spec((1, E)),      # Wk^T, bk
                    _const_spec((E, E)), _const_spec((1, E)),      # Wv^T, bv
                    _const_spec((E, E)), _const_spec((1, E)),      # Wo^T, bo
                ],
                out_specs=out_spec),
            compiler_params=cparams,
        )(pad_b(query), pad_b(key), pad_b(value), mask_i32,
          prepared['wq_t'], prepared['bq'], prepared['wk_t'], prepared['bk'],
          prepared['wv_t'], prepared['bv'], prepared['wo_t'], prepared['bo'])

    return out[:B] if B_pad != B else out


# ---------------------------------------------------------------------------
# Pure-JAX reference mirroring the PyTorch forward (eval mode)
# ---------------------------------------------------------------------------
def _reference(query, key, value, attn_mask, params, num_heads):
    B, S, E = query.shape
    Dh = E // num_heads

    def lin(x, w, b):
        return x @ w.T + b

    Q = lin(query, params['wq'], params['bq']).reshape(B, S, num_heads, Dh).transpose(0, 2, 1, 3)
    K = lin(key, params['wk'], params['bk']).reshape(B, S, num_heads, Dh).transpose(0, 2, 1, 3)
    V = lin(value, params['wv'], params['bv']).reshape(B, S, num_heads, Dh).transpose(0, 2, 1, 3)

    scores = jnp.einsum('bhqd,bhkd->bhqk', Q, K) / math.sqrt(Dh)
    scores = jnp.where((attn_mask != 0)[None, None], -1e9, scores)
    attn = jax.nn.softmax(scores, axis=-1)
    ctx = jnp.einsum('bhqk,bhkd->bhqd', attn, V)
    ctx = ctx.transpose(0, 2, 1, 3).reshape(B, S, E)
    return lin(ctx, params['wo'], params['bo'])


if __name__ == "__main__":
    B, S, E, H = 2, 8, 32, 4

    key0 = jax.random.PRNGKey(0)
    ks = jax.random.split(key0, 12)

    def w(k):  # deterministic "Linear" weight, PyTorch convention (out, in)
        return (jax.random.normal(k, (E, E), jnp.float32) * 0.05).astype(jnp.float32)

    def b(k):
        return (jax.random.normal(k, (E,), jnp.float32) * 0.05).astype(jnp.float32)

    params = {
        'wq': w(ks[0]), 'bq': b(ks[1]),
        'wk': w(ks[2]), 'bk': b(ks[3]),
        'wv': w(ks[4]), 'bv': b(ks[5]),
        'wo': w(ks[6]), 'bo': b(ks[7]),
    }

    query = jax.random.normal(ks[8], (B, S, E), jnp.float32)
    key_in = jax.random.normal(ks[9], (B, S, E), jnp.float32)
    value = jax.random.normal(ks[10], (B, S, E), jnp.float32)

    # Causal mask: nonzero == masked (filled with -1e9), shared across batch/heads.
    attn_mask = jnp.triu(jnp.ones((S, S), jnp.int32), k=1).astype(jnp.int32)

    ref_cross = _reference(query, key_in, value, attn_mask, params, H)
    ref_self = _reference(query, query, query, attn_mask, params, H)

    # f32 compute path (distinct q/k/v): exact parity with the PyTorch-equivalent ref.
    prep_f32 = prepare_mha_params(params)
    out = custom_multihead_attention(query, key_in, value, attn_mask, prep_f32, H)
    out = jax.block_until_ready(out)
    assert out.shape == (B, S, E)
    assert jnp.allclose(out, ref_cross, atol=1e-4, rtol=1e-4), "f32 cross kernel mismatch"

    # Self-attention fast path (fused QKV weight).
    out_self = custom_multihead_attention(query, query, query, attn_mask, prep_f32, H)
    out_self = jax.block_until_ready(out_self)
    assert jnp.allclose(out_self, ref_self, atol=1e-4, rtol=1e-4), "self-attn kernel mismatch"

    # bf16 MXU operands with f32 accumulation: validated against a looser tolerance.
    prep_bf16 = prepare_mha_params(params, compute_dtype=jnp.bfloat16)
    out_bf16 = custom_multihead_attention(query, key_in, value, attn_mask, prep_bf16, H)
    out_bf16 = jax.block_until_ready(out_bf16)
    assert jnp.allclose(out_bf16, ref_cross, atol=2e-2, rtol=2e-2), "bf16 kernel mismatch"

    print("KERNEL_OK")
</pallas_src>

<mosaic_0001>
module attributes {stable_mosaic.version = 11 : i64} {
  func.func @_mha_cross_kernel(%arg0: i32, %arg1: memref<1x8x32xf32, #tpu.memory_space<vmem>>, %arg2: memref<1x8x32xf32, #tpu.memory_space<vmem>>, %arg3: memref<1x8x32xf32, #tpu.memory_space<vmem>>, %arg4: memref<8x8xi32, #tpu.memory_space<vmem>>, %arg5: memref<32x32xf32, #tpu.memory_space<vmem>>, %arg6: memref<1x32xf32, #tpu.memory_space<vmem>>, %arg7: memref<32x32xf32, #tpu.memory_space<vmem>>, %arg8: memref<1x32xf32, #tpu.memory_space<vmem>>, %arg9: memref<32x32xf32, #tpu.memory_space<vmem>>, %arg10: memref<1x32xf32, #tpu.memory_space<vmem>>, %arg11: memref<32x32xf32, #tpu.memory_space<vmem>>, %arg12: memref<1x32xf32, #tpu.memory_space<vmem>>, %arg13: memref<1x8x32xf32, #tpu.memory_space<vmem>>) attributes {dimension_semantics = [#tpu.dimension_semantics<parallel>], iteration_bounds = array<i64: 2>, scalar_prefetch = 0 : i64, scratch_operands = 0 : i64, tpu.core_type = #tpu.core_type<tc>, window_params = [{transform_indices = @transform_0, window_bounds = array<i64: 1, 8, 32>}, {transform_indices = @transform_1, window_bounds = array<i64: 1, 8, 32>}, {transform_indices = @transform_2, window_bounds = array<i64: 1, 8, 32>}, {pipeline_mode = #tpu.pipeline_mode<synchronous>, transform_indices = @transform_3, window_bounds = array<i64: 8, 8>}, {pipeline_mode = #tpu.pipeline_mode<synchronous>, transform_indices = @transform_4, window_bounds = array<i64: 32, 32>}, {pipeline_mode = #tpu.pipeline_mode<synchronous>, transform_indices = @transform_5, window_bounds = array<i64: 1, 32>}, {pipeline_mode = #tpu.pipeline_mode<synchronous>, transform_indices = @transform_6, window_bounds = array<i64: 32, 32>}, {pipeline_mode = #tpu.pipeline_mode<synchronous>, transform_indices = @transform_7, window_bounds = array<i64: 1, 32>}, {pipeline_mode = #tpu.pipeline_mode<synchronous>, transform_indices = @transform_8, window_bounds = array<i64: 32, 32>}, {pipeline_mode = #tpu.pipeline_mode<synchronous>, transform_indices = @transform_9, window_bounds = array<i64: 1, 32>}, {pipeline_mode = #tpu.pipeline_mode<synchronous>, transform_indices = @transform_10, window_bounds = array<i64: 32, 32>}, {pipeline_mode = #tpu.pipeline_mode<synchronous>, transform_indices = @transform_11, window_bounds = array<i64: 1, 32>}, {transform_indices = @transform_12, window_bounds = array<i64: 1, 8, 32>}]} {
    %c0 = arith.constant 0 : index
    %c0_0 = arith.constant 0 : index
    %c0_1 = arith.constant 0 : index
    %0 = vector.load %arg1[%c0, %c0_0, %c0_1] : memref<1x8x32xf32, #tpu.memory_space<vmem>>, vector<1x8x32xf32>
    %1 = vector.shape_cast %0 : vector<1x8x32xf32> to vector<8x32xf32>
    %c0_2 = arith.constant 0 : index
    %c0_3 = arith.constant 0 : index
    %c0_4 = arith.constant 0 : index
    %2 = vector.load %arg2[%c0_2, %c0_3, %c0_4] : memref<1x8x32xf32, #tpu.memory_space<vmem>>, vector<1x8x32xf32>
    %3 = vector.shape_cast %2 : vector<1x8x32xf32> to vector<8x32xf32>
    %c0_5 = arith.constant 0 : index
    %c0_6 = arith.constant 0 : index
    %c0_7 = arith.constant 0 : index
    %4 = vector.load %arg3[%c0_5, %c0_6, %c0_7] : memref<1x8x32xf32, #tpu.memory_space<vmem>>, vector<1x8x32xf32>
    %5 = vector.shape_cast %4 : vector<1x8x32xf32> to vector<8x32xf32>
    %c0_8 = arith.constant 0 : index
    %c0_9 = arith.constant 0 : index
    %6 = vector.load %arg5[%c0_8, %c0_9] : memref<32x32xf32, #tpu.memory_space<vmem>>, vector<32x32xf32>
    %cst = arith.constant dense<0.000000e+00> : vector<8x32xf32>
    %7 = tpu.matmul %1, %6, %cst {dimension_numbers = #tpu.dot_dimension_numbers<[1], [0], [0], [1], [0, 0, 1, 1], [], []>} : vector<8x32xf32>, vector<32x32xf32>, vector<8x32xf32> -> vector<8x32xf32>
    %c0_10 = arith.constant 0 : index
    %c0_11 = arith.constant 0 : index
    %8 = vector.load %arg6[%c0_10, %c0_11] : memref<1x32xf32, #tpu.memory_space<vmem>>, vector<1x32xf32>
    %9 = vector.broadcast %8 : vector<1x32xf32> to vector<8x32xf32>
    %10 = arith.addf %7, %9 : vector<8x32xf32>
    %c0_12 = arith.constant 0 : index
    %c0_13 = arith.constant 0 : index
    %11 = vector.load %arg7[%c0_12, %c0_13] : memref<32x32xf32, #tpu.memory_space<vmem>>, vector<32x32xf32>
    %cst_14 = arith.constant dense<0.000000e+00> : vector<8x32xf32>
    %12 = tpu.matmul %3, %11, %cst_14 {dimension_numbers = #tpu.dot_dimension_numbers<[1], [0], [0], [1], [0, 0, 1, 1], [], []>} : vector<8x32xf32>, vector<32x32xf32>, vector<8x32xf32> -> vector<8x32xf32>
    %c0_15 = arith.constant 0 : index
    %c0_16 = arith.constant 0 : index
    %13 = vector.load %arg8[%c0_15, %c0_16] : memref<1x32xf32, #tpu.memory_space<vmem>>, vector<1x32xf32>
    %14 = vector.broadcast %13 : vector<1x32xf32> to vector<8x32xf32>
    %15 = arith.addf %12, %14 : vector<8x32xf32>
    %c0_17 = arith.constant 0 : index
    %c0_18 = arith.constant 0 : index
    %16 = vector.load %arg9[%c0_17, %c0_18] : memref<32x32xf32, #tpu.memory_space<vmem>>, vector<32x32xf32>
    %cst_19 = arith.constant dense<0.000000e+00> : vector<8x32xf32>
    %17 = tpu.matmul %5, %16, %cst_19 {dimension_numbers = #tpu.dot_dimension_numbers<[1], [0], [0], [1], [0, 0, 1, 1], [], []>} : vector<8x32xf32>, vector<32x32xf32>, vector<8x32xf32> -> vector<8x32xf32>
    %c0_20 = arith.constant 0 : index
    %c0_21 = arith.constant 0 : index
    %18 = vector.load %arg10[%c0_20, %c0_21] : memref<1x32xf32, #tpu.memory_space<vmem>>, vector<1x32xf32>
    %19 = vector.broadcast %18 : vector<1x32xf32> to vector<8x32xf32>
    %20 = arith.addf %17, %19 : vector<8x32xf32>
    %c0_22 = arith.constant 0 : index
    %c0_23 = arith.constant 0 : index
    %21 = vector.load %arg4[%c0_22, %c0_23] : memref<8x8xi32, #tpu.memory_space<vmem>>, vector<8x8xi32>
    %c0_24 = arith.constant 0 : index
    %c0_25 = arith.constant 0 : index
    %22 = vector.load %arg11[%c0_24, %c0_25] : memref<32x32xf32, #tpu.memory_space<vmem>>, vector<32x32xf32>
    %c0_26 = arith.constant 0 : index
    %c0_27 = arith.constant 0 : index
    %23 = vector.load %arg12[%c0_26, %c0_27] : memref<1x32xf32, #tpu.memory_space<vmem>>, vector<1x32xf32>
    %cst_28 = arith.constant 0.353553385 : f32
    %24 = vector.broadcast %cst_28 : f32 to vector<8x32xf32>
    %25 = arith.mulf %10, %24 : vector<8x32xf32>
    %26 = vector.shape_cast %25 : vector<8x32xf32> to vector<1x8x32xf32>
    %27 = vector.shape_cast %15 : vector<8x32xf32> to vector<1x8x32xf32>
    %28 = vector.shape_cast %20 : vector<8x32xf32> to vector<1x8x32xf32>
    %c0_i32 = arith.constant 0 : i32
    %29 = vector.broadcast %c0_i32 : i32 to vector<8x8xi32>
    %30 = arith.cmpi ne, %21, %29 : vector<8x8xi32>
    %31 = vector.shape_cast %30 : vector<8x8xi1> to vector<1x8x8xi1>
    %32 = vector.extract_strided_slice %26 {offsets = [0, 0, 0], sizes = [1, 8, 8], strides = [1, 1, 1]} : vector<1x8x32xf32> to vector<1x8x8xf32>
    %33 = vector.extract_strided_slice %27 {offsets = [0, 0, 0], sizes = [1, 8, 8], strides = [1, 1, 1]} : vector<1x8x32xf32> to vector<1x8x8xf32>
    %34 = vector.extract_strided_slice %28 {offsets = [0, 0, 0], sizes = [1, 8, 8], strides = [1, 1, 1]} : vector<1x8x32xf32> to vector<1x8x8xf32>
    "tpu.trace_start"() <{level = 10 : i32, message = "bqd,bkd->bqk"}> : () -> ()
    %cst_29 = arith.constant dense<0.000000e+00> : vector<1x8x8xf32>
    %35 = tpu.matmul %32, %33, %cst_29 {dimension_numbers = #tpu.dot_dimension_numbers<[2], [2], [1], [1], [0, 0, 0, 1, 1, 1], [0], [0]>} : vector<1x8x8xf32>, vector<1x8x8xf32>, vector<1x8x8xf32> -> vector<1x8x8xf32>
    %cst_30 = arith.constant -1.000000e+09 : f32
    "tpu.trace_stop"() : () -> ()
    %36 = vector.broadcast %cst_30 : f32 to vector<1x8x8xf32>
    %37 = arith.select %31, %36, %35 : vector<1x8x8xi1>, vector<1x8x8xf32>
    %cst_31 = arith.constant dense<0xFF800000> : vector<1x8xf32>
    %38 = vector.multi_reduction <maximumf>, %37, %cst_31 [2] : vector<1x8x8xf32> to vector<1x8xf32>
    %39 = vector.shape_cast %38 : vector<1x8xf32> to vector<1x8x1xf32>
    %40 = vector.broadcast %39 : vector<1x8x1xf32> to vector<1x8x8xf32>
    %41 = arith.subf %37, %40 : vector<1x8x8xf32>
    %42 = math.exp %41 : vector<1x8x8xf32>
    %cst_32 = arith.constant dense<0.000000e+00> : vector<1x8xf32>
    %43 = vector.multi_reduction <add>, %42, %cst_32 [2] : vector<1x8x8xf32> to vector<1x8xf32>
    %44 = vector.shape_cast %43 : vector<1x8xf32> to vector<1x8x1xf32>
    "tpu.trace_start"() <{level = 10 : i32, message = "bqk,bkd->bqd"}> : () -> ()
    %cst_33 = arith.constant dense<0.000000e+00> : vector<1x8x8xf32>
    %45 = tpu.matmul %42, %34, %cst_33 {dimension_numbers = #tpu.dot_dimension_numbers<[2], [1], [1], [2], [0, 0, 0, 1, 1, 2], [0], [0]>} : vector<1x8x8xf32>, vector<1x8x8xf32>, vector<1x8x8xf32> -> vector<1x8x8xf32>
    "tpu.trace_stop"() : () -> ()
    %cst_34 = arith.constant 1.000000e+00 : f32
    %46 = vector.broadcast %cst_34 : f32 to vector<1x8x1xf32>
    %47 = arith.divf %46, %44 : vector<1x8x1xf32>
    %48 = vector.broadcast %47 : vector<1x8x1xf32> to vector<1x8x8xf32>
    %49 = arith.mulf %45, %48 : vector<1x8x8xf32>
    %50 = vector.extract_strided_slice %26 {offsets = [0, 0, 8], sizes = [1, 8, 8], strides = [1, 1, 1]} : vector<1x8x32xf32> to vector<1x8x8xf32>
    %51 = vector.extract_strided_slice %27 {offsets = [0, 0, 8], sizes = [1, 8, 8], strides = [1, 1, 1]} : vector<1x8x32xf32> to vector<1x8x8xf32>
    %52 = vector.extract_strided_slice %28 {offsets = [0, 0, 8], sizes = [1, 8, 8], strides = [1, 1, 1]} : vector<1x8x32xf32> to vector<1x8x8xf32>
    "tpu.trace_start"() <{level = 10 : i32, message = "bqd,bkd->bqk"}> : () -> ()
    %cst_35 = arith.constant dense<0.000000e+00> : vector<1x8x8xf32>
    %53 = tpu.matmul %50, %51, %cst_35 {dimension_numbers = #tpu.dot_dimension_numbers<[2], [2], [1], [1], [0, 0, 0, 1, 1, 1], [0], [0]>} : vector<1x8x8xf32>, vector<1x8x8xf32>, vector<1x8x8xf32> -> vector<1x8x8xf32>
    %cst_36 = arith.constant -1.000000e+09 : f32
    "tpu.trace_stop"() : () -> ()
    %54 = vector.broadcast %cst_36 : f32 to vector<1x8x8xf32>
    %55 = arith.select %31, %54, %53 : vector<1x8x8xi1>, vector<1x8x8xf32>
    %cst_37 = arith.constant dense<0xFF800000> : vector<1x8xf32>
    %56 = vector.multi_reduction <maximumf>, %55, %cst_37 [2] : vector<1x8x8xf32> to vector<1x8xf32>
    %57 = vector.shape_cast %56 : vector<1x8xf32> to vector<1x8x1xf32>
    %58 = vector.broadcast %57 : vector<1x8x1xf32> to vector<1x8x8xf32>
    %59 = arith.subf %55, %58 : vector<1x8x8xf32>
    %60 = math.exp %59 : vector<1x8x8xf32>
    %cst_38 = arith.constant dense<0.000000e+00> : vector<1x8xf32>
    %61 = vector.multi_reduction <add>, %60, %cst_38 [2] : vector<1x8x8xf32> to vector<1x8xf32>
    %62 = vector.shape_cast %61 : vector<1x8xf32> to vector<1x8x1xf32>
    "tpu.trace_start"() <{level = 10 : i32, message = "bqk,bkd->bqd"}> : () -> ()
    %cst_39 = arith.constant dense<0.000000e+00> : vector<1x8x8xf32>
    %63 = tpu.matmul %60, %52, %cst_39 {dimension_numbers = #tpu.dot_dimension_numbers<[2], [1], [1], [2], [0, 0, 0, 1, 1, 2], [0], [0]>} : vector<1x8x8xf32>, vector<1x8x8xf32>, vector<1x8x8xf32> -> vector<1x8x8xf32>
    "tpu.trace_stop"() : () -> ()
    %cst_40 = arith.constant 1.000000e+00 : f32
    %64 = vector.broadcast %cst_40 : f32 to vector<1x8x1xf32>
    %65 = arith.divf %64, %62 : vector<1x8x1xf32>
    %66 = vector.broadcast %65 : vector<1x8x1xf32> to vector<1x8x8xf32>
    %67 = arith.mulf %63, %66 : vector<1x8x8xf32>
    %68 = vector.extract_strided_slice %26 {offsets = [0, 0, 16], sizes = [1, 8, 8], strides = [1, 1, 1]} : vector<1x8x32xf32> to vector<1x8x8xf32>
    %69 = vector.extract_strided_slice %27 {offsets = [0, 0, 16], sizes = [1, 8, 8], strides = [1, 1, 1]} : vector<1x8x32xf32> to vector<1x8x8xf32>
    %70 = vector.extract_strided_slice %28 {offsets = [0, 0, 16], sizes = [1, 8, 8], strides = [1, 1, 1]} : vector<1x8x32xf32> to vector<1x8x8xf32>
    "tpu.trace_start"() <{level = 10 : i32, message = "bqd,bkd->bqk"}> : () -> ()
    %cst_41 = arith.constant dense<0.000000e+00> : vector<1x8x8xf32>
    %71 = tpu.matmul %68, %69, %cst_41 {dimension_numbers = #tpu.dot_dimension_numbers<[2], [2], [1], [1], [0, 0, 0, 1, 1, 1], [0], [0]>} : vector<1x8x8xf32>, vector<1x8x8xf32>, vector<1x8x8xf32> -> vector<1x8x8xf32>
    %cst_42 = arith.constant -1.000000e+09 : f32
    "tpu.trace_stop"() : () -> ()
    %72 = vector.broadcast %cst_42 : f32 to vector<1x8x8xf32>
    %73 = arith.select %31, %72, %71 : vector<1x8x8xi1>, vector<1x8x8xf32>
    %cst_43 = arith.constant dense<0xFF800000> : vector<1x8xf32>
    %74 = vector.multi_reduction <maximumf>, %73, %cst_43 [2] : vector<1x8x8xf32> to vector<1x8xf32>
    %75 = vector.shape_cast %74 : vector<1x8xf32> to vector<1x8x1xf32>
    %76 = vector.broadcast %75 : vector<1x8x1xf32> to vector<1x8x8xf32>
    %77 = arith.subf %73, %76 : vector<1x8x8xf32>
    %78 = math.exp %77 : vector<1x8x8xf32>
    %cst_44 = arith.constant dense<0.000000e+00> : vector<1x8xf32>
    %79 = vector.multi_reduction <add>, %78, %cst_44 [2] : vector<1x8x8xf32> to vector<1x8xf32>
    %80 = vector.shape_cast %79 : vector<1x8xf32> to vector<1x8x1xf32>
    "tpu.trace_start"() <{level = 10 : i32, message = "bqk,bkd->bqd"}> : () -> ()
    %cst_45 = arith.constant dense<0.000000e+00> : vector<1x8x8xf32>
    %81 = tpu.matmul %78, %70, %cst_45 {dimension_numbers = #tpu.dot_dimension_numbers<[2], [1], [1], [2], [0, 0, 0, 1, 1, 2], [0], [0]>} : vector<1x8x8xf32>, vector<1x8x8xf32>, vector<1x8x8xf32> -> vector<1x8x8xf32>
    "tpu.trace_stop"() : () -> ()
    %cst_46 = arith.constant 1.000000e+00 : f32
    %82 = vector.broadcast %cst_46 : f32 to vector<1x8x1xf32>
    %83 = arith.divf %82, %80 : vector<1x8x1xf32>
    %84 = vector.broadcast %83 : vector<1x8x1xf32> to vector<1x8x8xf32>
    %85 = arith.mulf %81, %84 : vector<1x8x8xf32>
    %86 = vector.extract_strided_slice %26 {offsets = [0, 0, 24], sizes = [1, 8, 8], strides = [1, 1, 1]} : vector<1x8x32xf32> to vector<1x8x8xf32>
    %87 = vector.extract_strided_slice %27 {offsets = [0, 0, 24], sizes = [1, 8, 8], strides = [1, 1, 1]} : vector<1x8x32xf32> to vector<1x8x8xf32>
    %88 = vector.extract_strided_slice %28 {offsets = [0, 0, 24], sizes = [1, 8, 8], strides = [1, 1, 1]} : vector<1x8x32xf32> to vector<1x8x8xf32>
    "tpu.trace_start"() <{level = 10 : i32, message = "bqd,bkd->bqk"}> : () -> ()
    %cst_47 = arith.constant dense<0.000000e+00> : vector<1x8x8xf32>
    %89 = tpu.matmul %86, %87, %cst_47 {dimension_numbers = #tpu.dot_dimension_numbers<[2], [2], [1], [1], [0, 0, 0, 1, 1, 1], [0], [0]>} : vector<1x8x8xf32>, vector<1x8x8xf32>, vector<1x8x8xf32> -> vector<1x8x8xf32>
    %cst_48 = arith.constant -1.000000e+09 : f32
    "tpu.trace_stop"() : () -> ()
    %90 = vector.broadcast %cst_48 : f32 to vector<1x8x8xf32>
    %91 = arith.select %31, %90, %89 : vector<1x8x8xi1>, vector<1x8x8xf32>
    %cst_49 = arith.constant dense<0xFF800000> : vector<1x8xf32>
    %92 = vector.multi_reduction <maximumf>, %91, %cst_49 [2] : vector<1x8x8xf32> to vector<1x8xf32>
    %93 = vector.shape_cast %92 : vector<1x8xf32> to vector<1x8x1xf32>
    %94 = vector.broadcast %93 : vector<1x8x1xf32> to vector<1x8x8xf32>
    %95 = arith.subf %91, %94 : vector<1x8x8xf32>
    %96 = math.exp %95 : vector<1x8x8xf32>
    %cst_50 = arith.constant dense<0.000000e+00> : vector<1x8xf32>
    %97 = vector.multi_reduction <add>, %96, %cst_50 [2] : vector<1x8x8xf32> to vector<1x8xf32>
    %98 = vector.shape_cast %97 : vector<1x8xf32> to vector<1x8x1xf32>
    "tpu.trace_start"() <{level = 10 : i32, message = "bqk,bkd->bqd"}> : () -> ()
    %cst_51 = arith.constant dense<0.000000e+00> : vector<1x8x8xf32>
    %99 = tpu.matmul %96, %88, %cst_51 {dimension_numbers = #tpu.dot_dimension_numbers<[2], [1], [1], [2], [0, 0, 0, 1, 1, 2], [0], [0]>} : vector<1x8x8xf32>, vector<1x8x8xf32>, vector<1x8x8xf32> -> vector<1x8x8xf32>
    "tpu.trace_stop"() : () -> ()
    %cst_52 = arith.constant 1.000000e+00 : f32
    %100 = vector.broadcast %cst_52 : f32 to vector<1x8x1xf32>
    %101 = arith.divf %100, %98 : vector<1x8x1xf32>
    %102 = vector.broadcast %101 : vector<1x8x1xf32> to vector<1x8x8xf32>
    %103 = arith.mulf %99, %102 : vector<1x8x8xf32>
    %104 = tpu.concatenate %49, %67, %85, %103 in 2 : vector<1x8x8xf32>, vector<1x8x8xf32>, vector<1x8x8xf32>, vector<1x8x8xf32> -> vector<1x8x32xf32>
    %105 = vector.shape_cast %104 : vector<1x8x32xf32> to vector<8x32xf32>
    %cst_53 = arith.constant dense<0.000000e+00> : vector<8x32xf32>
    %106 = tpu.matmul %105, %22, %cst_53 {dimension_numbers = #tpu.dot_dimension_numbers<[1], [0], [0], [1], [0, 0, 1, 1], [], []>} : vector<8x32xf32>, vector<32x32xf32>, vector<8x32xf32> -> vector<8x32xf32>
    %107 = vector.broadcast %23 : vector<1x32xf32> to vector<8x32xf32>
    %108 = arith.addf %106, %107 : vector<8x32xf32>
    %109 = vector.shape_cast %108 : vector<8x32xf32> to vector<1x8x32xf32>
    %c0_54 = arith.constant 0 : index
    %c0_55 = arith.constant 0 : index
    %c0_56 = arith.constant 0 : index
    %110 = vector.load %arg13[%c0_54, %c0_55, %c0_56] : memref<1x8x32xf32, #tpu.memory_space<vmem>>, vector<1x8x32xf32>
    tpu.vector_store %arg13[%c0_54, %c0_55, %c0_56], %109 {strides = array<i32>} : memref<1x8x32xf32, #tpu.memory_space<vmem>>, vector<1x8x32xf32>,
    return
  }
  func.func @transform_0(%arg0: i32) -> (i32, i32, i32) {
    %c0_i32 = arith.constant 0 : i32
    %c0_i32_0 = arith.constant 0 : i32
    %c0_i32_1 = arith.constant 0 : i32
    return %arg0, %c0_i32, %c0_i32_0 : i32, i32, i32
  }
  func.func @transform_1(%arg0: i32) -> (i32, i32, i32) {
    %c0_i32 = arith.constant 0 : i32
    %c0_i32_0 = arith.constant 0 : i32
    %c0_i32_1 = arith.constant 0 : i32
    return %arg0, %c0_i32, %c0_i32_0 : i32, i32, i32
  }
  func.func @transform_2(%arg0: i32) -> (i32, i32, i32) {
    %c0_i32 = arith.constant 0 : i32
    %c0_i32_0 = arith.constant 0 : i32
    %c0_i32_1 = arith.constant 0 : i32
    return %arg0, %c0_i32, %c0_i32_0 : i32, i32, i32
  }
  func.func @transform_3(%arg0: i32) -> (i32, i32) {
    %c0_i32 = arith.constant 0 : i32
    %c0_i32_0 = arith.constant 0 : i32
    %c0_i32_1 = arith.constant 0 : i32
    return %c0_i32, %c0_i32_0 : i32, i32
  }
  func.func @transform_4(%arg0: i32) -> (i32, i32) {
    %c0_i32 = arith.constant 0 : i32
    %c0_i32_0 = arith.constant 0 : i32
    %c0_i32_1 = arith.constant 0 : i32
    return %c0_i32, %c0_i32_0 : i32, i32
  }
  func.func @transform_5(%arg0: i32) -> (i32, i32) {
    %c0_i32 = arith.constant 0 : i32
    %c0_i32_0 = arith.constant 0 : i32
    %c0_i32_1 = arith.constant 0 : i32
    return %c0_i32, %c0_i32_0 : i32, i32
  }
  func.func @transform_6(%arg0: i32) -> (i32, i32) {
    %c0_i32 = arith.constant 0 : i32
    %c0_i32_0 = arith.constant 0 : i32
    %c0_i32_1 = arith.constant 0 : i32
    return %c0_i32, %c0_i32_0 : i32, i32
  }
  func.func @transform_7(%arg0: i32) -> (i32, i32) {
    %c0_i32 = arith.constant 0 : i32
    %c0_i32_0 = arith.constant 0 : i32
    %c0_i32_1 = arith.constant 0 : i32
    return %c0_i32, %c0_i32_0 : i32, i32
  }
  func.func @transform_8(%arg0: i32) -> (i32, i32) {
    %c0_i32 = arith.constant 0 : i32
    %c0_i32_0 = arith.constant 0 : i32
    %c0_i32_1 = arith.constant 0 : i32
    return %c0_i32, %c0_i32_0 : i32, i32
  }
  func.func @transform_9(%arg0: i32) -> (i32, i32) {
    %c0_i32 = arith.constant 0 : i32
    %c0_i32_0 = arith.constant 0 : i32
    %c0_i32_1 = arith.constant 0 : i32
    return %c0_i32, %c0_i32_0 : i32, i32
  }
  func.func @transform_10(%arg0: i32) -> (i32, i32) {
    %c0_i32 = arith.constant 0 : i32
    %c0_i32_0 = arith.constant 0 : i32
    %c0_i32_1 = arith.constant 0 : i32
    return %c0_i32, %c0_i32_0 : i32, i32
  }
  func.func @transform_11(%arg0: i32) -> (i32, i32) {
    %c0_i32 = arith.constant 0 : i32
    %c0_i32_0 = arith.constant 0 : i32
    %c0_i32_1 = arith.constant 0 : i32
    return %c0_i32, %c0_i32_0 : i32, i32
  }
  func.func @transform_12(%arg0: i32) -> (i32, i32, i32) {
    %c0_i32 = arith.constant 0 : i32
    %c0_i32_0 = arith.constant 0 : i32
    %c0_i32_1 = arith.constant 0 : i32
    return %arg0, %c0_i32, %c0_i32_0 : i32, i32, i32
  }
}

</mosaic_0001>

<llo_original>
// kernel: tpu_custom_call.1
$region0: #{tpu_custom_call.1}
  #allocation0 [shape = 'u32[]', space=smem, size = 0x4, offset = 0x4, fixed_abs, tag = 'smem constant byte address 0x4 - core index']
  #allocation1 [shape = 'u32[72,128]{1,0:T(1,128)}', space=vmem, size = 0x9000, scoped, tag = 'internal scratch']
  %s0 = inlined_call_operand.hbm [shape: f32[2,8,32], index: 0, kind: input, shape index: {}]
  %s1 = inlined_call_operand.hbm [shape: f32[2,8,32], index: 1, kind: input, shape index: {}]
  %s2 = inlined_call_operand.hbm [shape: f32[2,8,32], index: 2, kind: input, shape index: {}]
  %s3 = inlined_call_operand.hbm [shape: s32[8,8], index: 3, kind: input, shape index: {}]
  %s4 = inlined_call_operand.hbm [shape: f32[32,32], index: 4, kind: input, shape index: {}]
  %s5 = inlined_call_operand.vmem [shape: f32[1,32], index: 5, kind: input, shape index: {}]
  %s6 = inlined_call_operand.hbm [shape: f32[32,32], index: 6, kind: input, shape index: {}]
  %s7 = inlined_call_operand.vmem [shape: f32[1,32], index: 7, kind: input, shape index: {}]
  %s8 = inlined_call_operand.hbm [shape: f32[32,32], index: 8, kind: input, shape index: {}]
  %s9 = inlined_call_operand.vmem [shape: f32[1,32], index: 9, kind: input, shape index: {}]
  %s10 = inlined_call_operand.hbm [shape: f32[32,32], index: 10, kind: input, shape index: {}]
  %s11 = inlined_call_operand.vmem [shape: f32[1,32], index: 11, kind: input, shape index: {}]
  %s12 = inlined_call_operand.hbm [shape: f32[2,8,32], index: 12, kind: output, shape index: {}]
  %s13 = sld [smem:[#allocation0]]
  $region113: #{tpu_custom_call.1} parent=0
    _
  %s15 = ssub.s32 1, %s13
  %s16 = scalar_select 0, %s15, %s13
  $region1: #{tpu_custom_call.1} parent=0
    #allocation2 [shape = 'u8[8192]{0}', space=vmem, size = 0x2000, scoped, tag = 'input window, operand 0']
    #allocation3 [shape = 's32[2]{0}', space=sflag, size = 0x8, scoped, tag = 'scoped memory for tpu_custom_call.1']
    #allocation4 [shape = 's32[2]{0}', space=sflag, size = 0x8, scoped, tag = 'scoped memory for tpu_custom_call.1']
    #allocation5 [shape = 'u8[8192]{0}', space=vmem, size = 0x2000, scoped, tag = 'input window, operand 1']
    #allocation6 [shape = 's32[2]{0}', space=sflag, size = 0x8, scoped, tag = 'scoped memory for tpu_custom_call.1']
    #allocation7 [shape = 'u8[8192]{0}', space=vmem, size = 0x2000, scoped, tag = 'input window, operand 2']
    #allocation8 [shape = 'u8[4096]{0}', space=vmem, size = 0x1000, scoped, tag = 'input window, operand 3, single buffered']
    #allocation9 [shape = 's32[1]{0}', space=sflag, size = 0x4, scoped, tag = 'scoped memory for tpu_custom_call.1']
    #allocation10 [shape = 'u8[16384]{0}', space=vmem, size = 0x4000, scoped, tag = 'input window, operand 4, single buffered']
    #allocation11 [shape = 'u8[16384]{0}', space=vmem, size = 0x4000, scoped, tag = 'input window, operand 6, single buffered']
    #allocation12 [shape = 's32[1]{0}', space=sflag, size = 0x4, scoped, tag = 'scoped memory for tpu_custom_call.1']
    #allocation13 [shape = 'u8[16384]{0}', space=vmem, size = 0x4000, scoped, tag = 'input window, operand 8, single buffered']
    #allocation14 [shape = 'u8[16384]{0}', space=vmem, size = 0x4000, scoped, tag = 'input window, operand 10, single buffered']
    #allocation15 [shape = 's32[1]{0}', space=sflag, size = 0x4, scoped, tag = 'scoped memory for tpu_custom_call.1']
    #allocation16 [shape = 'u8[8192]{0}', space=vmem, size = 0x2000, scoped, tag = 'output window, operand 0']
    %17 = vsyncpa [#allocation3], 0
    %s18 = scalar_lea.sflag [#allocation3], 1
    %19 = vsyncpa %s18, 0
    %20 = vsyncpa [#allocation6], 0
    %s21 = scalar_lea.sflag [#allocation6], 1
    %22 = vsyncpa %s21, 0
    %23 = vsyncpa [#allocation9], 0
    %24 = vsyncpa [#allocation12], 0
    %25 = vsyncpa [#allocation15], 0
    %26 = vsyncpa [#allocation4], 0
    %s27 = scalar_lea.sflag [#allocation4], 1
    %28 = vsyncpa %s27, 0
    loop: start=0, step=1, limit=4
    $region2: #{tpu_custom_call.1} parent=1 // loop_pre_header
      _
    $region3: #{tpu_custom_call.1} parent=1 // loop_header
      %s30 = sphi 0, %s34
      %p31 = scmp.ge.s32.totalorder %s30, 4
      %s40 = sphi 0, %s42
      %s43 = sphi 0, %s40
      %s44 = sphi 0, %s43
      %s60 = sphi 0, %s44
      %s66 = sphi 0, %s68
      %s69 = sphi 0, %s66
      %s70 = sphi 0, %s69
      %s86 = sphi 0, %s70
      %s92 = sphi 0, %s94
      %s95 = sphi 0, %s92
      %s96 = sphi 0, %s95
      %s112 = sphi 0, %s96
      %s116 = sphi 0, %s116
      %s118 = sphi 0, %s116
      %s119 = sphi 0, %s118
      %s133 = sphi 0, %s119
      %s137 = sphi 0, %s137
      %s139 = sphi 0, %s137
      %s140 = sphi 0, %s139
      %s154 = sphi 0, %s140
      %s158 = sphi 0, %s158
      %s160 = sphi 0, %s158
      %s161 = sphi 0, %s160
      %s175 = sphi 0, %s161
      %s179 = sphi 0, %s179
      %s181 = sphi 0, %s179
      %s182 = sphi 0, %s181
      %s196 = sphi 0, %s182
      %s200 = sphi 0, %s200
      %s202 = sphi 0, %s200
      %s203 = sphi 0, %s202
      %s217 = sphi 0, %s203
      %s221 = sphi 0, %s221
      %s223 = sphi 0, %s221
      %s224 = sphi 0, %s223
      %s238 = sphi 0, %s224
      %s242 = sphi 0, %s242
      %s244 = sphi 0, %s242
      %s245 = sphi 0, %s244
      %s259 = sphi 0, %s245
      %s263 = sphi 0, %s263
      %s265 = sphi 0, %s263
      %s266 = sphi 0, %s265
      %s280 = sphi 0, %s266
      %s284 = sphi 0, %s284
      %s286 = sphi 0, %s284
      %s287 = sphi 0, %s286
      %s301 = sphi 0, %s287
      %s307 = sphi 0, %s309
      %s310 = sphi 0, %s307
      %s311 = sphi 0, %s310
      %s327 = sphi 0, %s311
    $region4: #{tpu_custom_call.1} parent=1 // loop_header_branch
      %33 = sbr.rel (%p31) target = $region8
    $region5: #{tpu_custom_call.1} parent=1 // loop_body
      %s35 = ssub.s32 %s30, 1
      %s36 = ssub.s32 %s30, 2
      %s37 = sadd.s32 %s30, 1
      %s38 = ssub.s32 %s30, %s37
      %p39 = scmp.eq.s32.totalorder %s38, 0
      %s41 = sadd.s32 %s40, 1
      %s42 = scalar_select %p39, %s40, %s41
      %p45 = pneg %p39
      %p46 = scmp.eq.s32.totalorder %s30, 1
      %p47 = por %p45, %p46
      %p48 = scmp.ne.s32.totalorder %s40, %s43
      %p49 = scmp.eq.s32.totalorder %s30, 0
      %p50 = por %p48, %p49
      %p51 = scmp.ne.s32.totalorder %s40, %s43
      %p52 = scmp.eq.s32.totalorder %s35, 1
      %p53 = por %p51, %p52
      %p54 = scmp.ne.s32.totalorder %s43, %s44
      %p55 = scmp.eq.s32.totalorder %s35, 0
      %p56 = por %p54, %p55
      %p57 = scmp.ne.s32.totalorder %s43, %s44
      %p58 = scmp.eq.s32.totalorder %s36, 1
      %p59 = por %p57, %p58
      %p61 = scmp.ne.s32.totalorder %s44, %s60
      %p62 = scmp.eq.s32.totalorder %s36, 0
      %p63 = por %p61, %p62
      %s64 = ssub.s32 %s30, %s37
      %p65 = scmp.eq.s32.totalorder %s64, 0
      %s67 = sadd.s32 %s66, 1
      %s68 = scalar_select %p65, %s66, %s67
      %p71 = pneg %p65
      %p72 = scmp.eq.s32.totalorder %s30, 1
      %p73 = por %p71, %p72
      %p74 = scmp.ne.s32.totalorder %s66, %s69
      %p75 = scmp.eq.s32.totalorder %s30, 0
      %p76 = por %p74, %p75
      %p77 = scmp.ne.s32.totalorder %s66, %s69
      %p78 = scmp.eq.s32.totalorder %s35, 1
      %p79 = por %p77, %p78
      %p80 = scmp.ne.s32.totalorder %s69, %s70
      %p81 = scmp.eq.s32.totalorder %s35, 0
      %p82 = por %p80, %p81
      %p83 = scmp.ne.s32.totalorder %s69, %s70
      %p84 = scmp.eq.s32.totalorder %s36, 1
      %p85 = por %p83, %p84
      %p87 = scmp.ne.s32.totalorder %s70, %s86
      %p88 = scmp.eq.s32.totalorder %s36, 0
      %p89 = por %p87, %p88
      %s90 = ssub.s32 %s30, %s37
      %p91 = scmp.eq.s32.totalorder %s90, 0
      %s93 = sadd.s32 %s92, 1
      %s94 = scalar_select %p91, %s92, %s93
      %p97 = pneg %p91
      %p98 = scmp.eq.s32.totalorder %s30, 1
      %p99 = por %p97, %p98
      %p100 = scmp.ne.s32.totalorder %s92, %s95
      %p101 = scmp.eq.s32.totalorder %s30, 0
      %p102 = por %p100, %p101
      %p103 = scmp.ne.s32.totalorder %s92, %s95
      %p104 = scmp.eq.s32.totalorder %s35, 1
      %p105 = por %p103, %p104
      %p106 = scmp.ne.s32.totalorder %s95, %s96
      %p107 = scmp.eq.s32.totalorder %s35, 0
      %p108 = por %p106, %p107
      %p109 = scmp.ne.s32.totalorder %s95, %s96
      %p110 = scmp.eq.s32.totalorder %s36, 1
      %p111 = por %p109, %p110
      %p113 = scmp.ne.s32.totalorder %s96, %s112
      %p114 = scmp.eq.s32.totalorder %s36, 0
      %p115 = por %p113, %p114
      %s117 = sadd.s32 %s116, 1
      %p120 = scmp.eq.s32.totalorder %s30, 1
      %p121 = scmp.ne.s32.totalorder %s116, %s118
      %p122 = scmp.eq.s32.totalorder %s30, 0
      %p123 = por %p121, %p122
      %p124 = scmp.ne.s32.totalorder %s116, %s118
      %p125 = scmp.eq.s32.totalorder %s35, 1
      %p126 = por %p124, %p125
      %p127 = scmp.ne.s32.totalorder %s118, %s119
      %p128 = scmp.eq.s32.totalorder %s35, 0
      %p129 = por %p127, %p128
      %p130 = scmp.ne.s32.totalorder %s118, %s119
      %p131 = scmp.eq.s32.totalorder %s36, 1
      %p132 = por %p130, %p131
      %p134 = scmp.ne.s32.totalorder %s119, %s133
      %p135 = scmp.eq.s32.totalorder %s36, 0
      %p136 = por %p134, %p135
      %s138 = sadd.s32 %s137, 1
      %p141 = scmp.eq.s32.totalorder %s30, 1
      %p142 = scmp.ne.s32.totalorder %s137, %s139
      %p143 = scmp.eq.s32.totalorder %s30, 0
      %p144 = por %p142, %p143
      %p145 = scmp.ne.s32.totalorder %s137, %s139
      %p146 = scmp.eq.s32.totalorder %s35, 1
      %p147 = por %p145, %p146
      %p148 = scmp.ne.s32.totalorder %s139, %s140
      %p149 = scmp.eq.s32.totalorder %s35, 0
      %p150 = por %p148, %p149
      %p151 = scmp.ne.s32.totalorder %s139, %s140
      %p152 = scmp.eq.s32.totalorder %s36, 1
      %p153 = por %p151, %p152
      %p155 = scmp.ne.s32.totalorder %s140, %s154
      %p156 = scmp.eq.s32.totalorder %s36, 0
      %p157 = por %p155, %p156
      %s159 = sadd.s32 %s158, 1
      %p162 = scmp.eq.s32.totalorder %s30, 1
      %p163 = scmp.ne.s32.totalorder %s158, %s160
      %p164 = scmp.eq.s32.totalorder %s30, 0
      %p165 = por %p163, %p164
      %p166 = scmp.ne.s32.totalorder %s158, %s160
      %p167 = scmp.eq.s32.totalorder %s35, 1
      %p168 = por %p166, %p167
      %p169 = scmp.ne.s32.totalorder %s160, %s161
      %p170 = scmp.eq.s32.totalorder %s35, 0
      %p171 = por %p169, %p170
      %p172 = scmp.ne.s32.totalorder %s160, %s161
      %p173 = scmp.eq.s32.totalorder %s36, 1
      %p174 = por %p172, %p173
      %p176 = scmp.ne.s32.totalorder %s161, %s175
      %p177 = scmp.eq.s32.totalorder %s36, 0
      %p178 = por %p176, %p177
      %s180 = sadd.s32 %s179, 1
      %p183 = scmp.eq.s32.totalorder %s30, 1
      %p184 = scmp.ne.s32.totalorder %s179, %s181
      %p185 = scmp.eq.s32.totalorder %s30, 0
      %p186 = por %p184, %p185
      %p187 = scmp.ne.s32.totalorder %s179, %s181
      %p188 = scmp.eq.s32.totalorder %s35, 1
      %p189 = por %p187, %p188
      %p190 = scmp.ne.s32.totalorder %s181, %s182
      %p191 = scmp.eq.s32.totalorder %s35, 0
      %p192 = por %p190, %p191
      %p193 = scmp.ne.s32.totalorder %s181, %s182
      %p194 = scmp.eq.s32.totalorder %s36, 1
      %p195 = por %p193, %p194
      %p197 = scmp.ne.s32.totalorder %s182, %s196
      %p198 = scmp.eq.s32.totalorder %s36, 0
      %p199 = por %p197, %p198
      %s201 = sadd.s32 %s200, 1
      %p204 = scmp.eq.s32.totalorder %s30, 1
      %p205 = scmp.ne.s32.totalorder %s200, %s202
      %p206 = scmp.eq.s32.totalorder %s30, 0
      %p207 = por %p205, %p206
      %p208 = scmp.ne.s32.totalorder %s200, %s202
      %p209 = scmp.eq.s32.totalorder %s35, 1
      %p210 = por %p208, %p209
      %p211 = scmp.ne.s32.totalorder %s202, %s203
      %p212 = scmp.eq.s32.totalorder %s35, 0
      %p213 = por %p211, %p212
      %p214 = scmp.ne.s32.totalorder %s202, %s203
      %p215 = scmp.eq.s32.totalorder %s36, 1
      %p216 = por %p214, %p215
      %p218 = scmp.ne.s32.totalorder %s203, %s217
      %p219 = scmp.eq.s32.totalorder %s36, 0
      %p220 = por %p218, %p219
      %s222 = sadd.s32 %s221, 1
      %p225 = scmp.eq.s32.totalorder %s30, 1
      %p226 = scmp.ne.s32.totalorder %s221, %s223
      %p227 = scmp.eq.s32.totalorder %s30, 0
      %p228 = por %p226, %p227
      %p229 = scmp.ne.s32.totalorder %s221, %s223
      %p230 = scmp.eq.s32.totalorder %s35, 1
      %p231 = por %p229, %p230
      %p232 = scmp.ne.s32.totalorder %s223, %s224
      %p233 = scmp.eq.s32.totalorder %s35, 0
      %p234 = por %p232, %p233
      %p235 = scmp.ne.s32.totalorder %s223, %s224
      %p236 = scmp.eq.s32.totalorder %s36, 1
      %p237 = por %p235, %p236
      %p239 = scmp.ne.s32.totalorder %s224, %s238
      %p240 = scmp.eq.s32.totalorder %s36, 0
      %p241 = por %p239, %p240
      %s243 = sadd.s32 %s242, 1
      %p246 = scmp.eq.s32.totalorder %s30, 1
      %p247 = scmp.ne.s32.totalorder %s242, %s244
      %p248 = scmp.eq.s32.totalorder %s30, 0
      %p249 = por %p247, %p248
      %p250 = scmp.ne.s32.totalorder %s242, %s244
      %p251 = scmp.eq.s32.totalorder %s35, 1
      %p252 = por %p250, %p251
      %p253 = scmp.ne.s32.totalorder %s244, %s245
      %p254 = scmp.eq.s32.totalorder %s35, 0
      %p255 = por %p253, %p254
      %p256 = scmp.ne.s32.totalorder %s244, %s245
      %p257 = scmp.eq.s32.totalorder %s36, 1
      %p258 = por %p256, %p257
      %p260 = scmp.ne.s32.totalorder %s245, %s259
      %p261 = scmp.eq.s32.totalorder %s36, 0
      %p262 = por %p260, %p261
      %s264 = sadd.s32 %s263, 1
      %p267 = scmp.eq.s32.totalorder %s30, 1
      %p268 = scmp.ne.s32.totalorder %s263, %s265
      %p269 = scmp.eq.s32.totalorder %s30, 0
      %p270 = por %p268, %p269
      %p271 = scmp.ne.s32.totalorder %s263, %s265
      %p272 = scmp.eq.s32.totalorder %s35, 1
      %p273 = por %p271, %p272
      %p274 = scmp.ne.s32.totalorder %s265, %s266
      %p275 = scmp.eq.s32.totalorder %s35, 0
      %p276 = por %p274, %p275
      %p277 = scmp.ne.s32.totalorder %s265, %s266
      %p278 = scmp.eq.s32.totalorder %s36, 1
      %p279 = por %p277, %p278
      %p281 = scmp.ne.s32.totalorder %s266, %s280
      %p282 = scmp.eq.s32.totalorder %s36, 0
      %p283 = por %p281, %p282
      %s285 = sadd.s32 %s284, 1
      %p288 = scmp.eq.s32.totalorder %s30, 1
      %p289 = scmp.ne.s32.totalorder %s284, %s286
      %p290 = scmp.eq.s32.totalorder %s30, 0
      %p291 = por %p289, %p290
      %p292 = scmp.ne.s32.totalorder %s284, %s286
      %p293 = scmp.eq.s32.totalorder %s35, 1
      %p294 = por %p292, %p293
      %p295 = scmp.ne.s32.totalorder %s286, %s287
      %p296 = scmp.eq.s32.totalorder %s35, 0
      %p297 = por %p295, %p296
      %p298 = scmp.ne.s32.totalorder %s286, %s287
      %p299 = scmp.eq.s32.totalorder %s36, 1
      %p300 = por %p298, %p299
      %p302 = scmp.ne.s32.totalorder %s287, %s301
      %p303 = scmp.eq.s32.totalorder %s36, 0
      %p304 = por %p302, %p303
      %s305 = ssub.s32 %s30, %s37
      %p306 = scmp.eq.s32.totalorder %s305, 0
      %s308 = sadd.s32 %s307, 1
      %s309 = scalar_select %p306, %s307, %s308
      %p312 = pneg %p306
      %p313 = scmp.eq.s32.totalorder %s30, 1
      %p314 = por %p312, %p313
      %p315 = scmp.ne.s32.totalorder %s307, %s310
      %p316 = scmp.eq.s32.totalorder %s30, 0
      %p317 = por %p315, %p316
      %p318 = scmp.ne.s32.totalorder %s307, %s310
      %p319 = scmp.eq.s32.totalorder %s35, 1
      %p320 = por %p318, %p319
      %p321 = scmp.ne.s32.totalorder %s310, %s311
      %p322 = scmp.eq.s32.totalorder %s35, 0
      %p323 = por %p321, %p322
      %p324 = scmp.ne.s32.totalorder %s310, %s311
      %p325 = scmp.eq.s32.totalorder %s36, 1
      %p326 = por %p324, %p325
      %p328 = scmp.ne.s32.totalorder %s311, %s327
      %p329 = scmp.eq.s32.totalorder %s36, 0
      %p330 = por %p328, %p329
      %p331 = scmp.le.s32.totalorder 1, %s30
      %p332 = scmp.lt.s32.totalorder %s30, 3
      %p333 = pnand %p331, %p332
      %p334 = pneg %p333
      // Predicated region
      $region9: #{tpu_custom_call.1} parent=5 // pred_check
        _
      $region10: #{tpu_custom_call.1} parent=5 // pred_check_branch
        %336 = sbr.rel (%p333) target = $region12
      $region11: #{tpu_custom_call.1} parent=5 // pred_region
        %s337 = ssub.s32 %s30, 1
        // Predicated region
        $region13: #{tpu_custom_call.1} parent=11 // pred_check
          %p338 = pneg %p129
        $region14: #{tpu_custom_call.1} parent=11 // pred_check_branch
          %340 = sbr.rel (%p338) target = $region16
        $region15: #{tpu_custom_call.1} parent=11 // pred_region
          %342 = vsyncadd [#allocation9], 0
          %s344 = sshll.u32 %s3, 4
          %s345 = int_to_ptr.hbm [resolvable:$true] %s344
          %s346 = sshll.u32 [#allocation8], 4
          %s347 = int_to_ptr.vmem [resolvable:$true] %s346
          %349 = dma.hbm_to_vmem [thread:$0]  %s345, 128, %s347, [#allocation9]
        $region16: #{tpu_custom_call.1} parent=11 // pred_fallthru
          _
        // Predicated region
        $region17: #{tpu_custom_call.1} parent=11 // pred_check
          %p350 = pneg %p150
        $region18: #{tpu_custom_call.1} parent=11 // pred_check_branch
          %352 = sbr.rel (%p350) target = $region20
        $region19: #{tpu_custom_call.1} parent=11 // pred_region
          %354 = vsyncadd [#allocation9], 0
          %s355 = sshll.u32 %s4, 4
          %s356 = int_to_ptr.hbm [resolvable:$true] %s355
          %s357 = sshll.u32 [#allocation10], 4
          %s358 = int_to_ptr.vmem [resolvable:$true] %s357
          %363 = dma.hbm_to_vmem [thread:$0]  %s356, 512, %s358, [#allocation9], 128, 128, 8
        $region20: #{tpu_custom_call.1} parent=11 // pred_fallthru
          _
        // Predicated region
        $region21: #{tpu_custom_call.1} parent=11 // pred_check
          %p364 = pneg %p171
        $region22: #{tpu_custom_call.1} parent=11 // pred_check_branch
          %366 = sbr.rel (%p364) target = $region24
        $region23: #{tpu_custom_call.1} parent=11 // pred_region
          _
        $region24: #{tpu_custom_call.1} parent=11 // pred_fallthru
          _
        // Predicated region
        $region25: #{tpu_custom_call.1} parent=11 // pred_check
          %p367 = pneg %p192
        $region26: #{tpu_custom_call.1} parent=11 // pred_check_branch
          %369 = sbr.rel (%p367) target = $region28
        $region27: #{tpu_custom_call.1} parent=11 // pred_region
          %371 = vsyncadd [#allocation12], 0
          %s372 = sshll.u32 %s6, 4
          %s373 = int_to_ptr.hbm [resolvable:$true] %s372
          %s374 = sshll.u32 [#allocation11], 4
          %s375 = int_to_ptr.vmem [resolvable:$true] %s374
          %380 = dma.hbm_to_vmem [thread:$0]  %s373, 512, %s375, [#allocation12], 128, 128, 8
        $region28: #{tpu_custom_call.1} parent=11 // pred_fallthru
          _
        // Predicated region
        $region29: #{tpu_custom_call.1} parent=11 // pred_check
          %p381 = pneg %p213
        $region30: #{tpu_custom_call.1} parent=11 // pred_check_branch
          %383 = sbr.rel (%p381) target = $region32
        $region31: #{tpu_custom_call.1} parent=11 // pred_region
          _
        $region32: #{tpu_custom_call.1} parent=11 // pred_fallthru
          _
        // Predicated region
        $region33: #{tpu_custom_call.1} parent=11 // pred_check
          %p384 = pneg %p234
        $region34: #{tpu_custom_call.1} parent=11 // pred_check_branch
          %386 = sbr.rel (%p384) target = $region36
        $region35: #{tpu_custom_call.1} parent=11 // pred_region
          %388 = vsyncadd [#allocation12], 0
          %s389 = sshll.u32 %s8, 4
          %s390 = int_to_ptr.hbm [resolvable:$true] %s389
          %s391 = sshll.u32 [#allocation13], 4
          %s392 = int_to_ptr.vmem [resolvable:$true] %s391
          %397 = dma.hbm_to_vmem [thread:$0]  %s390, 512, %s392, [#allocation12], 128, 128, 8
        $region36: #{tpu_custom_call.1} parent=11 // pred_fallthru
          _
        // Predicated region
        $region37: #{tpu_custom_call.1} parent=11 // pred_check
          %p398 = pneg %p255
        $region38: #{tpu_custom_call.1} parent=11 // pred_check_branch
          %400 = sbr.rel (%p398) target = $region40
        $region39: #{tpu_custom_call.1} parent=11 // pred_region
          _
        $region40: #{tpu_custom_call.1} parent=11 // pred_fallthru
          _
        // Predicated region
        $region41: #{tpu_custom_call.1} parent=11 // pred_check
          %p401 = pneg %p276
        $region42: #{tpu_custom_call.1} parent=11 // pred_check_branch
          %403 = sbr.rel (%p401) target = $region44
        $region43: #{tpu_custom_call.1} parent=11 // pred_region
          %405 = vsyncadd [#allocation15], 0
          %s406 = sshll.u32 %s10, 4
          %s407 = int_to_ptr.hbm [resolvable:$true] %s406
          %s408 = sshll.u32 [#allocation14], 4
          %s409 = int_to_ptr.vmem [resolvable:$true] %s408
          %414 = dma.hbm_to_vmem [thread:$0]  %s407, 512, %s409, [#allocation15], 128, 128, 8
        $region44: #{tpu_custom_call.1} parent=11 // pred_fallthru
          _
        // Predicated region
        $region45: #{tpu_custom_call.1} parent=11 // pred_check
          %p415 = pneg %p297
        $region46: #{tpu_custom_call.1} parent=11 // pred_check_branch
          %417 = sbr.rel (%p415) target = $region48
        $region47: #{tpu_custom_call.1} parent=11 // pred_region
          _
        $region48: #{tpu_custom_call.1} parent=11 // pred_fallthru
          _
      $region12: #{tpu_custom_call.1} parent=5 // pred_fallthru
        _
      %p418 = scmp.lt.s32.totalorder %s30, 2
      // Predicated region
      $region49: #{tpu_custom_call.1} parent=5 // pred_check
        %p419 = pneg %p418
      $region50: #{tpu_custom_call.1} parent=5 // pred_check_branch
        %421 = sbr.rel (%p419) target = $region52
      $region51: #{tpu_custom_call.1} parent=5 // pred_region
        // Predicated region
        $region53: #{tpu_custom_call.1} parent=51 // pred_check
          %p422 = pneg %p50
        $region54: #{tpu_custom_call.1} parent=51 // pred_check_branch
          %424 = sbr.rel (%p422) target = $region56
        $region55: #{tpu_custom_call.1} parent=51 // pred_region
          %s425 = sand.u32 %s40, 1
          %s426 = scalar_lea.sflag [#allocation3], %s425
          %s427 = sand.u32 %s40, 1
          %s428 = smul.addr %s427, 8
          %s429 = scalar_lea.vmem [#allocation2], %s428
          %431 = vsyncadd %s426, 0
          %s432 = smul.addr %s30, 8
          %s433 = scalar_lea.hbm %s0, %s432
          %s435 = sshll.u32 %s433, 4
          %s436 = int_to_ptr.hbm [resolvable:$true] %s435
          %s437 = sshll.u32 %s429, 4
          %s438 = int_to_ptr.vmem [resolvable:$true] %s437
          %440 = dma.hbm_to_vmem [thread:$0]  %s436, 128, %s438, %s426
        $region56: #{tpu_custom_call.1} parent=51 // pred_fallthru
          _
        // Predicated region
        $region57: #{tpu_custom_call.1} parent=51 // pred_check
          %p441 = pneg %p76
        $region58: #{tpu_custom_call.1} parent=51 // pred_check_branch
          %443 = sbr.rel (%p441) target = $region60
        $region59: #{tpu_custom_call.1} parent=51 // pred_region
          %s444 = sand.u32 %s30, 1
          %s445 = scalar_lea.sflag [#allocation6], %s444
          %s446 = sand.u32 %s66, 1
          %s447 = smul.addr %s446, 8
          %s448 = scalar_lea.vmem [#allocation5], %s447
          %450 = vsyncadd %s445, 0
          %s451 = smul.addr %s30, 8
          %s452 = scalar_lea.hbm %s1, %s451
          %s454 = sshll.u32 %s452, 4
          %s455 = int_to_ptr.hbm [resolvable:$true] %s454
          %s456 = sshll.u32 %s448, 4
          %s457 = int_to_ptr.vmem [resolvable:$true] %s456
          %459 = dma.hbm_to_vmem [thread:$0]  %s455, 128, %s457, %s445
        $region60: #{tpu_custom_call.1} parent=51 // pred_fallthru
          _
        // Predicated region
        $region61: #{tpu_custom_call.1} parent=51 // pred_check
          %p460 = pneg %p102
        $region62: #{tpu_custom_call.1} parent=51 // pred_check_branch
          %462 = sbr.rel (%p460) target = $region64
        $region63: #{tpu_custom_call.1} parent=51 // pred_region
          %s463 = sand.u32 %s30, 1
          %s464 = scalar_lea.sflag [#allocation6], %s463
          %s465 = sand.u32 %s92, 1
          %s466 = smul.addr %s465, 8
          %s467 = scalar_lea.vmem [#allocation7], %s466
          %469 = vsyncadd %s464, 0
          %s470 = smul.addr %s30, 8
          %s471 = scalar_lea.hbm %s2, %s470
          %s473 = sshll.u32 %s471, 4
          %s474 = int_to_ptr.hbm [resolvable:$true] %s473
          %s475 = sshll.u32 %s467, 4
          %s476 = int_to_ptr.vmem [resolvable:$true] %s475
          %478 = dma.hbm_to_vmem [thread:$0]  %s474, 128, %s476, %s464
        $region64: #{tpu_custom_call.1} parent=51 // pred_fallthru
          _
      $region52: #{tpu_custom_call.1} parent=5 // pred_fallthru
        _
      %p479 = scmp.le.s32.totalorder 1, %s30
      %p480 = scmp.lt.s32.totalorder %s30, 3
      %p481 = pnand %p479, %p480
      %p482 = pneg %p481
      // Predicated region
      $region65: #{tpu_custom_call.1} parent=5 // pred_check
        _
      $region66: #{tpu_custom_call.1} parent=5 // pred_check_branch
        %484 = sbr.rel (%p481) target = $region68
      $region67: #{tpu_custom_call.1} parent=5 // pred_region
        %s485 = ssub.s32 %s30, 1
        %s486 = sand.u32 %s43, 1
        %s487 = scalar_lea.sflag [#allocation3], %s486
        %s488 = sand.u32 %s43, 1
        %s489 = smul.addr %s488, 8
        %s490 = scalar_lea.vmem [#allocation2], %s489
        // Predicated region
        $region69: #{tpu_custom_call.1} parent=67 // pred_check
          %p491 = pneg %p56
        $region70: #{tpu_custom_call.1} parent=67 // pred_check_branch
          %493 = sbr.rel (%p491) target = $region72
        $region71: #{tpu_custom_call.1} parent=67 // pred_region
          %495 = dma.done %s487, 128
        $region72: #{tpu_custom_call.1} parent=67 // pred_fallthru
          _
        %s496 = sand.u32 %s35, 1
        %s497 = scalar_lea.sflag [#allocation6], %s496
        %s498 = sand.u32 %s69, 1
        %s499 = smul.addr %s498, 8
        %s500 = scalar_lea.vmem [#allocation5], %s499
        // Predicated region
        $region73: #{tpu_custom_call.1} parent=67 // pred_check
          %p501 = pneg %p82
        $region74: #{tpu_custom_call.1} parent=67 // pred_check_branch
          %503 = sbr.rel (%p501) target = $region76
        $region75: #{tpu_custom_call.1} parent=67 // pred_region
          %505 = dma.done %s497, 128
        $region76: #{tpu_custom_call.1} parent=67 // pred_fallthru
          _
        %s506 = sand.u32 %s35, 1
        %s507 = scalar_lea.sflag [#allocation6], %s506
        %s508 = sand.u32 %s95, 1
        %s509 = smul.addr %s508, 8
        %s510 = scalar_lea.vmem [#allocation7], %s509
        // Predicated region
        $region77: #{tpu_custom_call.1} parent=67 // pred_check
          %p511 = pneg %p108
        $region78: #{tpu_custom_call.1} parent=67 // pred_check_branch
          %513 = sbr.rel (%p511) target = $region80
        $region79: #{tpu_custom_call.1} parent=67 // pred_region
          %515 = dma.done %s507, 128
        $region80: #{tpu_custom_call.1} parent=67 // pred_fallthru
          _
        // Predicated region
        $region81: #{tpu_custom_call.1} parent=67 // pred_check
          %p516 = pneg %p129
        $region82: #{tpu_custom_call.1} parent=67 // pred_check_branch
          %518 = sbr.rel (%p516) target = $region84
        $region83: #{tpu_custom_call.1} parent=67 // pred_region
          %520 = dma.done [#allocation9], 128
        $region84: #{tpu_custom_call.1} parent=67 // pred_fallthru
          _
        // Predicated region
        $region85: #{tpu_custom_call.1} parent=67 // pred_check
          %p521 = pneg %p150
        $region86: #{tpu_custom_call.1} parent=67 // pred_check_branch
          %523 = sbr.rel (%p521) target = $region88
        $region87: #{tpu_custom_call.1} parent=67 // pred_region
          %525 = dma.done [#allocation9], 512
        $region88: #{tpu_custom_call.1} parent=67 // pred_fallthru
          _
        // Predicated region
        $region89: #{tpu_custom_call.1} parent=67 // pred_check
          %p526 = pneg %p192
        $region90: #{tpu_custom_call.1} parent=67 // pred_check_branch
          %528 = sbr.rel (%p526) target = $region92
        $region91: #{tpu_custom_call.1} parent=67 // pred_region
          %530 = dma.done [#allocation12], 512
        $region92: #{tpu_custom_call.1} parent=67 // pred_fallthru
          _
        // Predicated region
        $region93: #{tpu_custom_call.1} parent=67 // pred_check
          %p531 = pneg %p234
        $region94: #{tpu_custom_call.1} parent=67 // pred_check_branch
          %533 = sbr.rel (%p531) target = $region96
        $region95: #{tpu_custom_call.1} parent=67 // pred_region
          %535 = dma.done [#allocation12], 512
        $region96: #{tpu_custom_call.1} parent=67 // pred_fallthru
          _
        // Predicated region
        $region97: #{tpu_custom_call.1} parent=67 // pred_check
          %p536 = pneg %p276
        $region98: #{tpu_custom_call.1} parent=67 // pred_check_branch
          %538 = sbr.rel (%p536) target = $region100
        $region99: #{tpu_custom_call.1} parent=67 // pred_region
          %540 = dma.done [#allocation15], 512
        $region100: #{tpu_custom_call.1} parent=67 // pred_fallthru
          _
        %s541 = sand.u32 %s43, 1
        %s542 = scalar_lea.sflag [#allocation3], %s541
        %s543 = sand.u32 %s43, 1
        %s544 = smul.addr %s543, 8
        %s545 = scalar_lea.vmem [#allocation2], %s544
        %p546 = pneg %p56
        %p547 = pneg %p53
        %s548 = sand.u32 %s35, 1
        %s549 = scalar_lea.sflag [#allocation6], %s548
        %s550 = sand.u32 %s69, 1
        %s551 = smul.addr %s550, 8
        %s552 = scalar_lea.vmem [#allocation5], %s551
        %p553 = pneg %p82
        %p554 = pneg %p79
        %s555 = sand.u32 %s35, 1
        %s556 = scalar_lea.sflag [#allocation6], %s555
        %s557 = sand.u32 %s95, 1
        %s558 = smul.addr %s557, 8
        %s559 = scalar_lea.vmem [#allocation7], %s558
        %p560 = pneg %p108
        %p561 = pneg %p105
        %p562 = pneg %p129
        %p563 = pneg %p126
        %p564 = pneg %p150
        %p565 = pneg %p147
        %p566 = pneg %p171
        %p567 = pneg %p168
        %p568 = pneg %p192
        %p569 = pneg %p189
        %p570 = pneg %p213
        %p571 = pneg %p210
        %p572 = pneg %p234
        %p573 = pneg %p231
        %p574 = pneg %p255
        %p575 = pneg %p252
        %p576 = pneg %p276
        %p577 = pneg %p273
        %p578 = pneg %p297
        %p579 = pneg %p294
        %p580 = pneg %p323
        %p581 = pneg %p320
        %s582 = sand.u32 %s310, 1
        %s583 = scalar_lea.sflag [#allocation4], %s582
        %s584 = sand.u32 %s310, 1
        %s585 = smul.addr %s584, 8
        %s586 = scalar_lea.vmem [#allocation16], %s585
        %v587 = vld [vmem:[%s490] sm:$0xff]
        %v588 = vld [vmem:[%s500] sm:$0xff]
        %v589 = vld [vmem:[%s510] sm:$0xff]
        %v590 = vld [vmem:[#allocation10] sm:$0xff]
        %v591 = vld [vmem:[#allocation10 + $0x8] sm:$0xff]
        %v592 = vld [vmem:[#allocation10 + $0x10] sm:$0xff]
        %v593 = vld [vmem:[#allocation10 + $0x18] sm:$0xff]
        %v594 = vld [vmem:[%s5] sm:$0x1]
        %v596 = vperm.slane %v594, 0
        %vm598 = vcmask 261120
        %v600 = vsel %vm598, %v587, 0
        %602 = vmatpush.msra.mxu0 0.0
        %603 = vmatpush.msra.mxu0 0.0
        %604 = vmatpush.msra.mxu0 0.0
        %605 = vmatpush.msra.mxu0 0.0
        %606 = vmatpush.msra.mxu0 0.0
        %607 = vmatpush.msra.mxu0 0.0
        %608 = vmatpush.msra.mxu0 0.0
        %609 = vmatpush.msra.mxu0 0.0
        %610 = vmatpush.msra.mxu0 0.0
        %611 = vmatpush.msra.mxu0 0.0
        %612 = vmatpush.msra.mxu0 0.0
        %613 = vmatpush.msra.mxu0 0.0
        %614 = vmatpush.msra.mxu0 %v593
        %615 = vmatpush.msra.mxu0 %v592
        %616 = vmatpush.msra.mxu0 %v591
        %617 = vmatpush.msra.mxu0 %v590
        %618 = vmatmul.f32.gmra.mxu0 %v600
        %v619 = vpop.f32.mrf.mxu0
        %v620 = vadd.f32 %v596, %v619
        %621 = vdwg.mxu0
        %v622 = vld [vmem:[#allocation11] sm:$0xff]
        %v623 = vld [vmem:[#allocation11 + $0x8] sm:$0xff]
        %v624 = vld [vmem:[#allocation11 + $0x10] sm:$0xff]
        %v625 = vld [vmem:[#allocation11 + $0x18] sm:$0xff]
        %v626 = vld [vmem:[%s7] sm:$0x1]
        %v628 = vperm.slane %v626, 0
        %v631 = vsel %vm598, %v588, 0
        %633 = vmatpush.msra.mxu0 0.0
        %634 = vmatpush.msra.mxu0 0.0
        %635 = vmatpush.msra.mxu0 0.0
        %636 = vmatpush.msra.mxu0 0.0
        %637 = vmatpush.msra.mxu0 0.0
        %638 = vmatpush.msra.mxu0 0.0
        %639 = vmatpush.msra.mxu0 0.0
        %640 = vmatpush.msra.mxu0 0.0
        %641 = vmatpush.msra.mxu0 0.0
        %642 = vmatpush.msra.mxu0 0.0
        %643 = vmatpush.msra.mxu0 0.0
        %644 = vmatpush.msra.mxu0 0.0
        %645 = vmatpush.msra.mxu0 %v625
        %646 = vmatpush.msra.mxu0 %v624
        %647 = vmatpush.msra.mxu0 %v623
        %648 = vmatpush.msra.mxu0 %v622
        %649 = vmatmul.f32.gmra.mxu0 %v631
        %v650 = vpop.f32.mrf.mxu0
        %v651 = vadd.f32 %v628, %v650
        %652 = vdwg.mxu0
        %v653 = vld [vmem:[#allocation13] sm:$0xff]
        %v654 = vld [vmem:[#allocation13 + $0x8] sm:$0xff]
        %v655 = vld [vmem:[#allocation13 + $0x10] sm:$0xff]
        %v656 = vld [vmem:[#allocation13 + $0x18] sm:$0xff]
        %v657 = vld [vmem:[%s9] sm:$0x1]
        %v659 = vperm.slane %v657, 0
        %v662 = vsel %vm598, %v589, 0
        %664 = vmatpush.msra.mxu0 0.0
        %665 = vmatpush.msra.mxu0 0.0
        %666 = vmatpush.msra.mxu0 0.0
        %667 = vmatpush.msra.mxu0 0.0
        %668 = vmatpush.msra.mxu0 0.0
        %669 = vmatpush.msra.mxu0 0.0
        %670 = vmatpush.msra.mxu0 0.0
        %671 = vmatpush.msra.mxu0 0.0
        %672 = vmatpush.msra.mxu0 0.0
        %673 = vmatpush.msra.mxu0 0.0
        %674 = vmatpush.msra.mxu0 0.0
        %675 = vmatpush.msra.mxu0 0.0
        %676 = vmatpush.msra.mxu0 %v656
        %677 = vmatpush.msra.mxu0 %v655
        %678 = vmatpush.msra.mxu0 %v654
        %679 = vmatpush.msra.mxu0 %v653
        %680 = vmatmul.f32.gmra.mxu0 %v662
        %v681 = vpop.f32.mrf.mxu0
        %v682 = vadd.f32 %v659, %v681
        %683 = vdwg.mxu0
        %v684 = vld [vmem:[#allocation8] sm:$0xff]
        %v685 = vld [vmem:[#allocation14] sm:$0xff]
        %v686 = vld [vmem:[#allocation14 + $0x8] sm:$0xff]
        %v687 = vld [vmem:[#allocation14 + $0x10] sm:$0xff]
        %v688 = vld [vmem:[#allocation14 + $0x18] sm:$0xff]
        %v689 = vld [vmem:[%s11] sm:$0x1]
        %v690 = vmul.f32 %v620, 0.35355338
        %vm691 = vcmp.ne.s32.totalorder %v684, 0
        %vm692 = vcmask 64512
        %v694 = vsel %vm692, %v690, 0
        %v697 = vsel %vm692, %v651, 0
        %699 = vmatpush.xpose.msra.mxu0 0.0
        %700 = vmatpush.xpose.msra.mxu0 0.0
        %701 = vmatpush.xpose.msra.mxu0 0.0
        %702 = vmatpush.xpose.msra.mxu0 0.0
        %703 = vmatpush.xpose.msra.mxu0 0.0
        %704 = vmatpush.xpose.msra.mxu0 0.0
        %705 = vmatpush.xpose.msra.mxu0 0.0
        %706 = vmatpush.xpose.msra.mxu0 0.0
        %707 = vmatpush.xpose.msra.mxu0 0.0
        %708 = vmatpush.xpose.msra.mxu0 0.0
        %709 = vmatpush.xpose.msra.mxu0 0.0
        %710 = vmatpush.xpose.msra.mxu0 0.0
        %711 = vmatpush.xpose.msra.mxu0 0.0
        %712 = vmatpush.xpose.msra.mxu0 0.0
        %713 = vmatpush.xpose.msra.mxu0 0.0
        %714 = vmatpush.xpose.msra.mxu0 %v697
        %715 = vmatmul.f32.gmra.mxu0 %v694
        %v716 = vpop.f32.mrf.mxu0
        %v717 = vadd.f32 0.0, %v716
        %718 = vdwg.mxu0
        %v719 = vsel %vm691, -1e+09, %v717
        %v720 = vsel %vm692, %v719, -inf
        %721 = vmax.xlane.f32.xlu0 %v720
        %v722 = vpop.xlane.xlu0 %721
        %v723 = vsub.f32 %v719, %v722
        %v724 = vmul.f32 %v723, 1.442695
        %v725 = vpow.pop %v724
        %v726 = vsel %vm692, %v725, 0.0
        %727 = vadd.xlane.f32.xlu0 %v726
        %v728 = vpop.xlane.xlu0 %727
        %v730 = vsel %vm692, %v725, 0
        %732 = vmatpush.msra.mxu0 0.0
        %733 = vmatpush.msra.mxu0 0.0
        %734 = vmatpush.msra.mxu0 0.0
        %735 = vmatpush.msra.mxu0 0.0
        %736 = vmatpush.msra.mxu0 0.0
        %737 = vmatpush.msra.mxu0 0.0
        %738 = vmatpush.msra.mxu0 0.0
        %739 = vmatpush.msra.mxu0 0.0
        %740 = vmatpush.msra.mxu0 0.0
        %741 = vmatpush.msra.mxu0 0.0
        %742 = vmatpush.msra.mxu0 0.0
        %743 = vmatpush.msra.mxu0 0.0
        %744 = vmatpush.msra.mxu0 0.0
        %745 = vmatpush.msra.mxu0 0.0
        %746 = vmatpush.msra.mxu0 0.0
        %747 = vmatpush.msra.mxu0 %v682
        %748 = vmatmul.f32.gmra.mxu0 %v730
        %v749 = vpop.f32.mrf.mxu0
        %v750 = vadd.f32 0.0, %v749
        %751 = vdwg.mxu0
        %v752 = vrcp.pop %v728
        %v753 = vmul.f32 %v728, %v752
        %v754 = vsub.f32 1.0, %v753
        %v755 = vmul.f32 %v752, %v754
        %v756 = vadd.f32 %v752, %v755
        %vm757 = vweird.f32 %v728
        %vm758 = vweird.f32 %v752
        %vm759 = vmor %vm757, %vm758
        %v760 = vsel %vm759, %v752, %v756
        %v761 = vand.u32 2147483647, %v728
        %vm762 = vcmp.eq.f32.partialorder %v761, 8.507059e+37
        %v763 = vand.u32 %v728, 2147483648
        %v764 = vor.u32 1.1754944e-38, %v763
        %v765 = vsel %vm762, %v764, %v760
        %v766 = vmul.f32 1.0, %v765
        %v767 = vmul.f32 %v750, %v766
        %768 = vrot.lane.b32.xlu0 %v690, 120
        %v769 = vpop.permute.xlu0 %768
        %770 = vrot.lane.b32.xlu0 %v651, 120
        %v771 = vpop.permute.xlu0 %770
        %v772 = vsel %vm692, %v769, 0
        %v774 = vsel %vm692, %v771, 0
        %776 = vmatpush.xpose.msra.mxu0 0.0
        %777 = vmatpush.xpose.msra.mxu0 0.0
        %778 = vmatpush.xpose.msra.mxu0 0.0
        %779 = vmatpush.xpose.msra.mxu0 0.0
        %780 = vmatpush.xpose.msra.mxu0 0.0
        %781 = vmatpush.xpose.msra.mxu0 0.0
        %782 = vmatpush.xpose.msra.mxu0 0.0
        %783 = vmatpush.xpose.msra.mxu0 0.0
        %784 = vmatpush.xpose.msra.mxu0 0.0
        %785 = vmatpush.xpose.msra.mxu0 0.0
        %786 = vmatpush.xpose.msra.mxu0 0.0
        %787 = vmatpush.xpose.msra.mxu0 0.0
        %788 = vmatpush.xpose.msra.mxu0 0.0
        %789 = vmatpush.xpose.msra.mxu0 0.0
        %790 = vmatpush.xpose.msra.mxu0 0.0
        %791 = vmatpush.xpose.msra.mxu0 %v774
        %792 = vmatmul.f32.gmra.mxu0 %v772
        %v793 = vpop.f32.mrf.mxu0
        %v794 = vadd.f32 0.0, %v793
        %795 = vdwg.mxu0
        %v796 = vsel %vm691, -1e+09, %v794
        %v797 = vsel %vm692, %v796, -inf
        %798 = vmax.xlane.f32.xlu0 %v797
        %v799 = vpop.xlane.xlu0 %798
        %v800 = vsub.f32 %v796, %v799
        %v801 = vmul.f32 %v800, 1.442695
        %v802 = vpow.pop %v801
        %v803 = vsel %vm692, %v802, 0.0
        %804 = vadd.xlane.f32.xlu0 %v803
        %v805 = vpop.xlane.xlu0 %804
        %807 = vrot.lane.b32.xlu0 %v682, 120
        %v808 = vpop.permute.xlu0 %807
        %v811 = vsel %vm692, %v802, 0
        %813 = vmatpush.msra.mxu0 0.0
        %814 = vmatpush.msra.mxu0 0.0
        %815 = vmatpush.msra.mxu0 0.0
        %816 = vmatpush.msra.mxu0 0.0
        %817 = vmatpush.msra.mxu0 0.0
        %818 = vmatpush.msra.mxu0 0.0
        %819 = vmatpush.msra.mxu0 0.0
        %820 = vmatpush.msra.mxu0 0.0
        %821 = vmatpush.msra.mxu0 0.0
        %822 = vmatpush.msra.mxu0 0.0
        %823 = vmatpush.msra.mxu0 0.0
        %824 = vmatpush.msra.mxu0 0.0
        %825 = vmatpush.msra.mxu0 0.0
        %826 = vmatpush.msra.mxu0 0.0
        %827 = vmatpush.msra.mxu0 0.0
        %828 = vmatpush.msra.mxu0 %v808
        %829 = vmatmul.f32.gmra.mxu0 %v811
        %v830 = vpop.f32.mrf.mxu0
        %v831 = vadd.f32 0.0, %v830
        %832 = vdwg.mxu0
        %v833 = vrcp.pop %v805
        %v834 = vmul.f32 %v805, %v833
        %v835 = vsub.f32 1.0, %v834
        %v836 = vmul.f32 %v833, %v835
        %v837 = vadd.f32 %v833, %v836
        %vm838 = vweird.f32 %v805
        %vm839 = vweird.f32 %v833
        %vm840 = vmor %vm838, %vm839
        %v841 = vsel %vm840, %v833, %v837
        %v842 = vand.u32 2147483647, %v805
        %vm843 = vcmp.eq.f32.partialorder %v842, 8.507059e+37
        %v844 = vand.u32 %v805, 2147483648
        %v845 = vor.u32 1.1754944e-38, %v844
        %v846 = vsel %vm843, %v845, %v841
        %v847 = vmul.f32 1.0, %v846
        %v848 = vmul.f32 %v831, %v847
        %849 = vrot.lane.b32.xlu0 %v690, 112
        %v850 = vpop.permute.xlu0 %849
        %851 = vrot.lane.b32.xlu0 %v651, 112
        %v852 = vpop.permute.xlu0 %851
        %v853 = vsel %vm692, %v850, 0
        %v855 = vsel %vm692, %v852, 0
        %857 = vmatpush.xpose.msra.mxu0 0.0
        %858 = vmatpush.xpose.msra.mxu0 0.0
        %859 = vmatpush.xpose.msra.mxu0 0.0
        %860 = vmatpush.xpose.msra.mxu0 0.0
        %861 = vmatpush.xpose.msra.mxu0 0.0
        %862 = vmatpush.xpose.msra.mxu0 0.0
        %863 = vmatpush.xpose.msra.mxu0 0.0
        %864 = vmatpush.xpose.msra.mxu0 0.0
        %865 = vmatpush.xpose.msra.mxu0 0.0
        %866 = vmatpush.xpose.msra.mxu0 0.0
        %867 = vmatpush.xpose.msra.mxu0 0.0
        %868 = vmatpush.xpose.msra.mxu0 0.0
        %869 = vmatpush.xpose.msra.mxu0 0.0
        %870 = vmatpush.xpose.msra.mxu0 0.0
        %871 = vmatpush.xpose.msra.mxu0 0.0
        %872 = vmatpush.xpose.msra.mxu0 %v855
        %873 = vmatmul.f32.gmra.mxu0 %v853
        %v874 = vpop.f32.mrf.mxu0
        %v875 = vadd.f32 0.0, %v874
        %876 = vdwg.mxu0
        %v877 = vsel %vm691, -1e+09, %v875
        %v878 = vsel %vm692, %v877, -inf
        %879 = vmax.xlane.f32.xlu0 %v878
        %v880 = vpop.xlane.xlu0 %879
        %v881 = vsub.f32 %v877, %v880
        %v882 = vmul.f32 %v881, 1.442695
        %v883 = vpow.pop %v882
        %v884 = vsel %vm692, %v883, 0.0
        %885 = vadd.xlane.f32.xlu0 %v884
        %v886 = vpop.xlane.xlu0 %885
        %887 = vrot.lane.b32.xlu0 %v682, 112
        %v888 = vpop.permute.xlu0 %887
        %v891 = vsel %vm692, %v883, 0
        %893 = vmatpush.msra.mxu0 0.0
        %894 = vmatpush.msra.mxu0 0.0
        %895 = vmatpush.msra.mxu0 0.0
        %896 = vmatpush.msra.mxu0 0.0
        %897 = vmatpush.msra.mxu0 0.0
        %898 = vmatpush.msra.mxu0 0.0
        %899 = vmatpush.msra.mxu0 0.0
        %900 = vmatpush.msra.mxu0 0.0
        %901 = vmatpush.msra.mxu0 0.0
        %902 = vmatpush.msra.mxu0 0.0
        %903 = vmatpush.msra.mxu0 0.0
        %904 = vmatpush.msra.mxu0 0.0
        %905 = vmatpush.msra.mxu0 0.0
        %906 = vmatpush.msra.mxu0 0.0
        %907 = vmatpush.msra.mxu0 0.0
        %908 = vmatpush.msra.mxu0 %v888
        %909 = vmatmul.f32.gmra.mxu0 %v891
        %v910 = vpop.f32.mrf.mxu0
        %v911 = vadd.f32 0.0, %v910
        %912 = vdwg.mxu0
        %v913 = vrcp.pop %v886
        %v914 = vmul.f32 %v886, %v913
        %v915 = vsub.f32 1.0, %v914
        %v916 = vmul.f32 %v913, %v915
        %v917 = vadd.f32 %v913, %v916
        %vm918 = vweird.f32 %v886
        %vm919 = vweird.f32 %v913
        %vm920 = vmor %vm918, %vm919
        %v921 = vsel %vm920, %v913, %v917
        %v922 = vand.u32 2147483647, %v886
        %vm923 = vcmp.eq.f32.partialorder %v922, 8.507059e+37
        %v924 = vand.u32 %v886, 2147483648
        %v925 = vor.u32 1.1754944e-38, %v924
        %v926 = vsel %vm923, %v925, %v921
        %v927 = vmul.f32 1.0, %v926
        %v928 = vmul.f32 %v911, %v927
        %929 = vrot.lane.b32.xlu0 %v690, 104
        %v930 = vpop.permute.xlu0 %929
        %931 = vrot.lane.b32.xlu0 %v651, 104
        %v932 = vpop.permute.xlu0 %931
        %v933 = vsel %vm692, %v930, 0
        %v935 = vsel %vm692, %v932, 0
        %937 = vmatpush.xpose.msra.mxu0 0.0
        %938 = vmatpush.xpose.msra.mxu0 0.0
        %939 = vmatpush.xpose.msra.mxu0 0.0
        %940 = vmatpush.xpose.msra.mxu0 0.0
        %941 = vmatpush.xpose.msra.mxu0 0.0
        %942 = vmatpush.xpose.msra.mxu0 0.0
        %943 = vmatpush.xpose.msra.mxu0 0.0
        %944 = vmatpush.xpose.msra.mxu0 0.0
        %945 = vmatpush.xpose.msra.mxu0 0.0
        %946 = vmatpush.xpose.msra.mxu0 0.0
        %947 = vmatpush.xpose.msra.mxu0 0.0
        %948 = vmatpush.xpose.msra.mxu0 0.0
        %949 = vmatpush.xpose.msra.mxu0 0.0
        %950 = vmatpush.xpose.msra.mxu0 0.0
        %951 = vmatpush.xpose.msra.mxu0 0.0
        %952 = vmatpush.xpose.msra.mxu0 %v935
        %953 = vmatmul.f32.gmra.mxu0 %v933
        %v954 = vpop.f32.mrf.mxu0
        %v955 = vadd.f32 0.0, %v954
        %956 = vdwg.mxu0
        %v957 = vsel %vm691, -1e+09, %v955
        %v958 = vsel %vm692, %v957, -inf
        %959 = vmax.xlane.f32.xlu0 %v958
        %v960 = vpop.xlane.xlu0 %959
        %v961 = vsub.f32 %v957, %v960
        %v962 = vmul.f32 %v961, 1.442695
        %v963 = vpow.pop %v962
        %v964 = vsel %vm692, %v963, 0.0
        %965 = vadd.xlane.f32.xlu0 %v964
        %v966 = vpop.xlane.xlu0 %965
        %967 = vrot.lane.b32.xlu0 %v682, 104
        %v968 = vpop.permute.xlu0 %967
        %v971 = vsel %vm692, %v963, 0
        %973 = vmatpush.msra.mxu0 0.0
        %974 = vmatpush.msra.mxu0 0.0
        %975 = vmatpush.msra.mxu0 0.0
        %976 = vmatpush.msra.mxu0 0.0
        %977 = vmatpush.msra.mxu0 0.0
        %978 = vmatpush.msra.mxu0 0.0
        %979 = vmatpush.msra.mxu0 0.0
        %980 = vmatpush.msra.mxu0 0.0
        %981 = vmatpush.msra.mxu0 0.0
        %982 = vmatpush.msra.mxu0 0.0
        %983 = vmatpush.msra.mxu0 0.0
        %984 = vmatpush.msra.mxu0 0.0
        %985 = vmatpush.msra.mxu0 0.0
        %986 = vmatpush.msra.mxu0 0.0
        %987 = vmatpush.msra.mxu0 0.0
        %988 = vmatpush.msra.mxu0 %v968
        %989 = vmatmul.f32.gmra.mxu0 %v971
        %v990 = vpop.f32.mrf.mxu0
        %v991 = vadd.f32 0.0, %v990
        %992 = vdwg.mxu0
        %v993 = vrcp.pop %v966
        %v994 = vmul.f32 %v966, %v993
        %v995 = vsub.f32 1.0, %v994
        %v996 = vmul.f32 %v993, %v995
        %v997 = vadd.f32 %v993, %v996
        %vm998 = vweird.f32 %v966
        %vm999 = vweird.f32 %v993
        %vm1000 = vmor %vm998, %vm999
        %v1001 = vsel %vm1000, %v993, %v997
        %v1002 = vand.u32 2147483647, %v966
        %vm1003 = vcmp.eq.f32.partialorder %v1002, 8.507059e+37
        %v1004 = vand.u32 %v966, 2147483648
        %v1005 = vor.u32 1.1754944e-38, %v1004
        %v1006 = vsel %vm1003, %v1005, %v1001
        %v1007 = vmul.f32 1.0, %v1006
        %v1008 = vmul.f32 %v991, %v1007
        %1010 = vrot.lane.b32.xlu0 %v848, 8
        %v1011 = vpop.permute.xlu0 %1010
        %1014 = vrot.lane.b32.xlu0 %v928, 16
        %v1015 = vpop.permute.xlu0 %1014
        %1018 = vrot.lane.b32.xlu0 %v1008, 24
        %v1019 = vpop.permute.xlu0 %1018
        %v1021 = vsel %vm692, %v767, %v1011
        %vm1022 = vcmask 130048
        %v1023 = vsel %vm1022, %v1021, %v1015
        %vm1024 = vcmask 195584
        %v1025 = vsel %vm1024, %v1023, %v1019
        %v1027 = vperm.slane %v689, 0
        %v1030 = vsel %vm598, %v1025, 0
        %1032 = vmatpush.msra.mxu0 0.0
        %1033 = vmatpush.msra.mxu0 0.0
        %1034 = vmatpush.msra.mxu0 0.0
        %1035 = vmatpush.msra.mxu0 0.0
        %1036 = vmatpush.msra.mxu0 0.0
        %1037 = vmatpush.msra.mxu0 0.0
        %1038 = vmatpush.msra.mxu0 0.0
        %1039 = vmatpush.msra.mxu0 0.0
        %1040 = vmatpush.msra.mxu0 0.0
        %1041 = vmatpush.msra.mxu0 0.0
        %1042 = vmatpush.msra.mxu0 0.0
        %1043 = vmatpush.msra.mxu0 0.0
        %1044 = vmatpush.msra.mxu0 %v688
        %1045 = vmatpush.msra.mxu0 %v687
        %1046 = vmatpush.msra.mxu0 %v686
        %1047 = vmatpush.msra.mxu0 %v685
        %1048 = vmatmul.f32.gmra.mxu0 %v1030
        %v1049 = vpop.f32.mrf.mxu0
        %v1050 = vadd.f32 %v1027, %v1049
        %1051 = vdwg.mxu0
        %1052 = vst.msk [vmem:[%s586] sm:$0xff] %vm598, %v1050
        %s1053 = sand.u32 %s310, 1
        %s1054 = scalar_lea.sflag [#allocation4], %s1053
        %s1055 = sand.u32 %s310, 1
        %s1056 = smul.addr %s1055, 8
        %s1057 = scalar_lea.vmem [#allocation16], %s1056
        // Predicated region
        $region101: #{tpu_custom_call.1} parent=67 // pred_check
          %p1058 = pneg %p320
        $region102: #{tpu_custom_call.1} parent=67 // pred_check_branch
          %1060 = sbr.rel (%p1058) target = $region104
        $region103: #{tpu_custom_call.1} parent=67 // pred_region
          %1062 = vsyncadd %s1054, 0
          %s1063 = smul.addr %s35, 8
          %s1064 = scalar_lea.hbm %s12, %s1063
          %s1066 = sshll.u32 %s1057, 4
          %s1067 = int_to_ptr.vmem [resolvable:$true] %s1066
          %s1068 = sshll.u32 %s1064, 4
          %s1069 = int_to_ptr.hbm [resolvable:$true] %s1068
          %1071 = dma.vmem_to_hbm [thread:$0]  %s1067, 128, %s1069, %s1054
        $region104: #{tpu_custom_call.1} parent=67 // pred_fallthru
          _
      $region68: #{tpu_custom_call.1} parent=5 // pred_fallthru
        _
      %p1072 = scmp.le.s32.totalorder 2, %s30
      // Predicated region
      $region105: #{tpu_custom_call.1} parent=5 // pred_check
        %p1073 = pneg %p1072
      $region106: #{tpu_custom_call.1} parent=5 // pred_check_branch
        %1075 = sbr.rel (%p1073) target = $region108
      $region107: #{tpu_custom_call.1} parent=5 // pred_region
        %s1076 = ssub.s32 %s30, 2
        // Predicated region
        $region109: #{tpu_custom_call.1} parent=107 // pred_check
          %p1077 = pneg %p326
        $region110: #{tpu_custom_call.1} parent=107 // pred_check_branch
          %1079 = sbr.rel (%p1077) target = $region112
        $region111: #{tpu_custom_call.1} parent=107 // pred_region
          %s1080 = sand.u32 %s311, 1
          %s1081 = scalar_lea.sflag [#allocation4], %s1080
          %s1082 = sand.u32 %s311, 1
          %s1083 = smul.addr %s1082, 8
          %s1084 = scalar_lea.vmem [#allocation16], %s1083
          %1086 = dma.done %s1081, 128
        $region112: #{tpu_custom_call.1} parent=107 // pred_fallthru
          _
      $region108: #{tpu_custom_call.1} parent=5 // pred_fallthru
        _
    $region6: #{tpu_custom_call.1} parent=1 // loop_footer
      %s34 = sadd.s32 1, %s30
    $region7: #{tpu_custom_call.1} parent=1 // loop_footer_branch
      %29 = sbr.rel target = $region3
    $region8: #{tpu_custom_call.1} parent=1 // loop_exit
      _
    %1087 = vsyncpa [#allocation3], 1
    %s1088 = scalar_lea.sflag [#allocation3], 1
    %1089 = vsyncpa %s1088, 1
    %1090 = vsyncpa [#allocation6], 1
    %s1091 = scalar_lea.sflag [#allocation6], 1
    %1092 = vsyncpa %s1091, 1
    %1093 = vsyncpa [#allocation9], 1
    %1094 = vsyncpa [#allocation12], 1
    %1095 = vsyncpa [#allocation15], 1
    %1096 = vsyncpa [#allocation4], 1
    %s1097 = scalar_lea.sflag [#allocation4], 1
    %1098 = vsyncpa %s1097, 1

</llo_original>
